<compile_context>
chip_gen: v7x
topology: tpu7x:2x2x1
jax: 0.10.0
libtpu: 0.0.40
codegen_flags: <defaults>
</compile_context>

<pallas_src>
import functools

import jax
import jax.numpy as jnp
from jax.experimental import pallas as pl
from jax.experimental.pallas import tpu as pltpu


# ----------------------------- Pallas kernel -------------------------------

def make_fused_lstm_kernel(T, B, H, num_layers):
    """Builds a kernel closure for a fixed (T, B, H, num_layers).

    Ref layout (positional):
      refs[0]                      x_ref      (T*B, D)   time-major flattened input
      refs[1 + 3*l + 0]            w_ih_ref   (Din, 4H)  layer l input weights (transposed)
      refs[1 + 3*l + 1]            w_hh_ref   (H, 4H)    layer l hidden weights (transposed)
      refs[1 + 3*l + 2]            b_ref      (1, 4H)    layer l combined bias (b_ih + b_hh)
      refs[1 + 3*L + 0]            fc_w_ref   (H, O)
      refs[1 + 3*L + 1]            fc_b_ref   (1, O)
      refs[1 + 3*L + 2]            out_ref    (B, O)
      refs[1 + 3*L + 3]            seq_buf    (T*B, H)   VMEM scratch: layer output sequence
      refs[1 + 3*L + 4]            gates_buf  (T*B, 4H)  VMEM scratch: hoisted input projection
    """

    def kernel(*refs):
        x_ref = refs[0]
        pos = 1
        layer_refs = []
        for _ in range(num_layers):
            layer_refs.append((refs[pos], refs[pos + 1], refs[pos + 2]))
            pos += 3
        fc_w_ref, fc_b_ref = refs[pos], refs[pos + 1]
        out_ref = refs[pos + 2]
        seq_buf, gates_buf = refs[pos + 3], refs[pos + 4]

        h_top = jnp.zeros((B, H), jnp.float32)

        for layer, (w_ih_ref, w_hh_ref, b_ref) in enumerate(layer_refs):
            # Layer input: raw x for layer 0, previous layer's sequence after.
            xin = x_ref[...] if layer == 0 else seq_buf[...]        # (T*B, Din)

            # --- Hoisted input projection: one big MXU matmul for all T steps.
            gates_buf[...] = (
                jnp.dot(xin, w_ih_ref[...], preferred_element_type=jnp.float32)
                + b_ref[...]
            )                                                        # (T*B, 4H)

            w_hh = w_hh_ref[...]                                     # (H, 4H), VMEM-resident
            write_seq = (layer + 1) < num_layers                     # top layer skips writeback

            def step(t, carry, *, w_hh=w_hh, write_seq=write_seq):
                h, c = carry
                row = pl.multiple_of(t * B, B)
                # Only the recurrent matmul sits on the serial chain.
                gates = gates_buf[pl.ds(row, B), :] + jnp.dot(
                    h, w_hh, preferred_element_type=jnp.float32
                )                                                    # (B, 4H)
                # Activate full 128-lane gate vregs (2 EUP passes), then slice.
                sg = jax.nn.sigmoid(gates)
                tg = jnp.tanh(gates)
                i_g = sg[:, 0 * H:1 * H]
                f_g = sg[:, 1 * H:2 * H]
                g_g = tg[:, 2 * H:3 * H]
                o_g = sg[:, 3 * H:4 * H]
                c_new = f_g * c + i_g * g_g
                h_new = o_g * jnp.tanh(c_new)
                if write_seq:
                    seq_buf[pl.ds(row, B), :] = h_new
                return (h_new, c_new)

            carry0 = (jnp.zeros((B, H), jnp.float32),
                      jnp.zeros((B, H), jnp.float32))
            h_top, _ = jax.lax.fori_loop(0, T, step, carry0, unroll=True)

        # Final fc on the last time step of the top layer, fused in-kernel.
        out_ref[...] = (
            jnp.dot(h_top, fc_w_ref[...], preferred_element_type=jnp.float32)
            + fc_b_ref[...]
        ).astype(out_ref.dtype)

    return kernel


# ------------------------------- wrappers ----------------------------------

@functools.partial(jax.jit, static_argnames=())
def lstm_forward(params, x_btd):
    """Matches the PyTorch module forward: multi-layer LSTM (zero init state),
    last time step of top layer, then fc.  x_btd: (B, T, D) -> (B, O)."""
    B, T, D = x_btd.shape
    H = params["layers"][0]["w_hh_t"].shape[0]
    O = params["fc_w_t"].shape[1]
    num_layers = len(params["layers"])

    # Time-major flatten (row index = t*B + b); tiny, folded into XLA prologue.
    x_flat = jnp.transpose(x_btd, (1, 0, 2)).reshape(T * B, D).astype(jnp.float32)

    inputs = [x_flat]
    in_specs = [pl.BlockSpec((T * B, D), lambda i: (0, 0))]
    for lp in params["layers"]:
        d_in = lp["w_ih_t"].shape[0]
        inputs += [lp["w_ih_t"], lp["w_hh_t"], lp["b"]]
        in_specs += [
            pl.BlockSpec((d_in, 4 * H), lambda i: (0, 0)),
            pl.BlockSpec((H, 4 * H), lambda i: (0, 0)),
            pl.BlockSpec((1, 4 * H), lambda i: (0, 0)),
        ]
    inputs += [params["fc_w_t"], params["fc_b"]]
    in_specs += [
        pl.BlockSpec((H, O), lambda i: (0, 0)),
        pl.BlockSpec((1, O), lambda i: (0, 0)),
    ]

    kernel = make_fused_lstm_kernel(T, B, H, num_layers)

    return pl.pallas_call(
        kernel,
        out_shape=jax.ShapeDtypeStruct((B, O), jnp.float32),
        grid_spec=pltpu.PrefetchScalarGridSpec(
            num_scalar_prefetch=0,
            grid=(1,),
            in_specs=in_specs,
            out_specs=pl.BlockSpec((B, O), lambda i: (0, 0)),
            scratch_shapes=[
                pltpu.VMEM((T * B, H), jnp.float32),       # seq_buf
                pltpu.VMEM((T * B, 4 * H), jnp.float32),   # gates_buf
            ],
        ),
        compiler_params=pltpu.CompilerParams(
            dimension_semantics=("arbitrary",),
        ),
    )(*inputs)


def init_params(key, input_dim, hidden_dim, num_layers, output_dim):
    """Deterministic synthetic parameters; same shapes/init scheme as nn.LSTM."""
    H = hidden_dim
    bound = 1.0 / jnp.sqrt(jnp.float32(H))
    params = {"layers": []}
    for layer in range(num_layers):
        d_in = input_dim if layer == 0 else hidden_dim
        key, k1, k2, k3, k4 = jax.random.split(key, 5)
        w_ih = jax.random.uniform(k1, (4 * H, d_in), jnp.float32, -bound, bound)
        w_hh = jax.random.uniform(k2, (4 * H, H), jnp.float32, -bound, bound)
        b_ih = jax.random.uniform(k3, (4 * H,), jnp.float32, -bound, bound)
        b_hh = jax.random.uniform(k4, (4 * H,), jnp.float32, -bound, bound)
        params["layers"].append(
            {
                "w_ih_t": w_ih.T,                      # (Din, 4H)
                "w_hh_t": w_hh.T,                      # (H, 4H)
                "b": (b_ih + b_hh).reshape(1, 4 * H),  # (1, 4H)
            }
        )
    key, k5, k6 = jax.random.split(key, 3)
    fb = 1.0 / jnp.sqrt(jnp.float32(H))
    fc_w = jax.random.uniform(k5, (output_dim, H), jnp.float32, -fb, fb)
    fc_b = jax.random.uniform(k6, (output_dim,), jnp.float32, -fb, fb)
    params["fc_w_t"] = fc_w.T                 # (H, O)
    params["fc_b"] = fc_b.reshape(1, -1)      # (1, O)
    return params


def lstm_forward_ref(params, x_btd):
    """Pure-JAX reference for the correctness check."""
    x = jnp.transpose(x_btd, (1, 0, 2)).astype(jnp.float32)  # (T, B, D)
    for lp in params["layers"]:
        T, B, _ = x.shape
        H = lp["w_hh_t"].shape[0]

        def step(carry, x_t):
            h, c = carry
            gates = x_t @ lp["w_ih_t"] + h @ lp["w_hh_t"] + lp["b"]
            i = jax.nn.sigmoid(gates[:, 0 * H:1 * H])
            f = jax.nn.sigmoid(gates[:, 1 * H:2 * H])
            g = jnp.tanh(gates[:, 2 * H:3 * H])
            o = jax.nn.sigmoid(gates[:, 3 * H:4 * H])
            c = f * c + i * g
            h = o * jnp.tanh(c)
            return (h, c), h

        init = (jnp.zeros((B, H), jnp.float32), jnp.zeros((B, H), jnp.float32))
        _, outs = jax.lax.scan(step, init, x)
        x = outs
    return x[-1] @ params["fc_w_t"] + params["fc_b"]


if __name__ == "__main__":
    batch, seq, input_dim = 2, 8, 8
    hidden_dim, num_layers, output_dim = 32, 2, 4

    key = jax.random.PRNGKey(0)
    key, kx, kp = jax.random.split(key, 3)
    x = jax.random.normal(kx, (batch, seq, input_dim), jnp.float32)
    params = init_params(kp, input_dim, hidden_dim, num_layers, output_dim)

    out = lstm_forward(params, x)
    out = jax.block_until_ready(out)

    ref = lstm_forward_ref(params, x)
    assert out.shape == (batch, output_dim)
    assert jnp.allclose(out, ref, rtol=2e-3, atol=2e-3)

    print("KERNEL_OK")
</pallas_src>

<mosaic_0001>
module attributes {stable_mosaic.version = 11 : i64} {
  func.func @kernel(%arg0: i32, %arg1: memref<16x8xf32, #tpu.memory_space<vmem>>, %arg2: memref<8x128xf32, #tpu.memory_space<vmem>>, %arg3: memref<32x128xf32, #tpu.memory_space<vmem>>, %arg4: memref<1x128xf32, #tpu.memory_space<vmem>>, %arg5: memref<32x128xf32, #tpu.memory_space<vmem>>, %arg6: memref<32x128xf32, #tpu.memory_space<vmem>>, %arg7: memref<1x128xf32, #tpu.memory_space<vmem>>, %arg8: memref<32x4xf32, #tpu.memory_space<vmem>>, %arg9: memref<1x4xf32, #tpu.memory_space<vmem>>, %arg10: memref<2x4xf32, #tpu.memory_space<vmem>>, %arg11: memref<16x32xf32, #tpu.memory_space<vmem>>, %arg12: memref<16x128xf32, #tpu.memory_space<vmem>>) attributes {dimension_semantics = [#tpu.dimension_semantics<arbitrary>], iteration_bounds = array<i64: 1>, scalar_prefetch = 0 : i64, scratch_operands = 2 : i64, tpu.core_type = #tpu.core_type<tc>, window_params = [{pipeline_mode = #tpu.pipeline_mode<synchronous>, transform_indices = @transform_0, window_bounds = array<i64: 16, 8>}, {pipeline_mode = #tpu.pipeline_mode<synchronous>, transform_indices = @transform_1, window_bounds = array<i64: 8, 128>}, {pipeline_mode = #tpu.pipeline_mode<synchronous>, transform_indices = @transform_2, window_bounds = array<i64: 32, 128>}, {pipeline_mode = #tpu.pipeline_mode<synchronous>, transform_indices = @transform_3, window_bounds = array<i64: 1, 128>}, {pipeline_mode = #tpu.pipeline_mode<synchronous>, transform_indices = @transform_4, window_bounds = array<i64: 32, 128>}, {pipeline_mode = #tpu.pipeline_mode<synchronous>, transform_indices = @transform_5, window_bounds = array<i64: 32, 128>}, {pipeline_mode = #tpu.pipeline_mode<synchronous>, transform_indices = @transform_6, window_bounds = array<i64: 1, 128>}, {pipeline_mode = #tpu.pipeline_mode<synchronous>, transform_indices = @transform_7, window_bounds = array<i64: 32, 4>}, {pipeline_mode = #tpu.pipeline_mode<synchronous>, transform_indices = @transform_8, window_bounds = array<i64: 1, 4>}, {pipeline_mode = #tpu.pipeline_mode<synchronous>, transform_indices = @transform_9, window_bounds = array<i64: 2, 4>}]} {
    %c0 = arith.constant 0 : index
    %c0_0 = arith.constant 0 : index
    %0 = vector.load %arg1[%c0, %c0_0] : memref<16x8xf32, #tpu.memory_space<vmem>>, vector<16x8xf32>
    %c0_1 = arith.constant 0 : index
    %c0_2 = arith.constant 0 : index
    %1 = vector.load %arg2[%c0_1, %c0_2] : memref<8x128xf32, #tpu.memory_space<vmem>>, vector<8x128xf32>
    %cst = arith.constant dense<0.000000e+00> : vector<16x128xf32>
    %2 = tpu.matmul %0, %1, %cst {dimension_numbers = #tpu.dot_dimension_numbers<[1], [0], [0], [1], [0, 0, 1, 1], [], []>} : vector<16x8xf32>, vector<8x128xf32>, vector<16x128xf32> -> vector<16x128xf32>
    %c0_3 = arith.constant 0 : index
    %c0_4 = arith.constant 0 : index
    %3 = vector.load %arg4[%c0_3, %c0_4] : memref<1x128xf32, #tpu.memory_space<vmem>>, vector<1x128xf32>
    %4 = vector.broadcast %3 : vector<1x128xf32> to vector<16x128xf32>
    %5 = arith.addf %2, %4 : vector<16x128xf32>
    %c0_5 = arith.constant 0 : index
    %c0_6 = arith.constant 0 : index
    %6 = vector.load %arg12[%c0_5, %c0_6] : memref<16x128xf32, #tpu.memory_space<vmem>>, vector<16x128xf32>
    tpu.vector_store %arg12[%c0_5, %c0_6], %5 {strides = array<i32>} : memref<16x128xf32, #tpu.memory_space<vmem>>, vector<16x128xf32>,
    %c0_7 = arith.constant 0 : index
    %c0_8 = arith.constant 0 : index
    %7 = vector.load %arg3[%c0_7, %c0_8] : memref<32x128xf32, #tpu.memory_space<vmem>>, vector<32x128xf32>
    %cst_9 = arith.constant 0.000000e+00 : f32
    %8 = vector.broadcast %cst_9 : f32 to vector<2x32xf32>
    %cst_10 = arith.constant 0.000000e+00 : f32
    %9 = vector.broadcast %cst_10 : f32 to vector<2x32xf32>
    %c0_i32 = arith.constant 0 : i32
    %c2_i32 = arith.constant 2 : i32
    %10 = arith.muli %c0_i32, %c2_i32 : i32
    %11 = tpu.assume_multiple %10, 2 : i32
    %12 = arith.index_cast %11 : i32 to index
    %c0_11 = arith.constant 0 : index
    %13 = vector.load %arg12[%12, %c0_11] : memref<16x128xf32, #tpu.memory_space<vmem>>, vector<2x128xf32>
    %cst_12 = arith.constant dense<0.000000e+00> : vector<2x128xf32>
    %14 = tpu.matmul %8, %7, %cst_12 {dimension_numbers = #tpu.dot_dimension_numbers<[1], [0], [0], [1], [0, 0, 1, 1], [], []>} : vector<2x32xf32>, vector<32x128xf32>, vector<2x128xf32> -> vector<2x128xf32>
    %15 = arith.addf %13, %14 : vector<2x128xf32>
    %16 = arith.negf %15 : vector<2x128xf32>
    %17 = math.exp %16 : vector<2x128xf32>
    %cst_13 = arith.constant 1.000000e+00 : f32
    %18 = vector.broadcast %cst_13 : f32 to vector<2x128xf32>
    %19 = arith.addf %18, %17 : vector<2x128xf32>
    %20 = arith.divf %18, %19 : vector<2x128xf32>
    %21 = math.tanh %15 : vector<2x128xf32>
    %22 = vector.extract_strided_slice %20 {offsets = [0, 0], sizes = [2, 32], strides = [1, 1]} : vector<2x128xf32> to vector<2x32xf32>
    %23 = vector.extract_strided_slice %20 {offsets = [0, 32], sizes = [2, 32], strides = [1, 1]} : vector<2x128xf32> to vector<2x32xf32>
    %24 = vector.extract_strided_slice %21 {offsets = [0, 64], sizes = [2, 32], strides = [1, 1]} : vector<2x128xf32> to vector<2x32xf32>
    %25 = vector.extract_strided_slice %20 {offsets = [0, 96], sizes = [2, 32], strides = [1, 1]} : vector<2x128xf32> to vector<2x32xf32>
    %26 = arith.mulf %23, %9 : vector<2x32xf32>
    %27 = arith.mulf %22, %24 : vector<2x32xf32>
    %28 = arith.addf %26, %27 : vector<2x32xf32>
    %29 = math.tanh %28 : vector<2x32xf32>
    %30 = arith.mulf %25, %29 : vector<2x32xf32>
    %31 = arith.index_cast %11 : i32 to index
    %c0_14 = arith.constant 0 : index
    %32 = vector.load %arg11[%31, %c0_14] : memref<16x32xf32, #tpu.memory_space<vmem>>, vector<2x32xf32>
    tpu.vector_store %arg11[%31, %c0_14], %30 {strides = array<i32>} : memref<16x32xf32, #tpu.memory_space<vmem>>, vector<2x32xf32>,
    %c1_i32 = arith.constant 1 : i32
    %c2_i32_15 = arith.constant 2 : i32
    %33 = arith.muli %c1_i32, %c2_i32_15 : i32
    %34 = tpu.assume_multiple %33, 2 : i32
    %35 = arith.index_cast %34 : i32 to index
    %c0_16 = arith.constant 0 : index
    %36 = vector.load %arg12[%35, %c0_16] : memref<16x128xf32, #tpu.memory_space<vmem>>, vector<2x128xf32>
    %cst_17 = arith.constant dense<0.000000e+00> : vector<2x128xf32>
    %37 = tpu.matmul %30, %7, %cst_17 {dimension_numbers = #tpu.dot_dimension_numbers<[1], [0], [0], [1], [0, 0, 1, 1], [], []>} : vector<2x32xf32>, vector<32x128xf32>, vector<2x128xf32> -> vector<2x128xf32>
    %38 = arith.addf %36, %37 : vector<2x128xf32>
    %39 = arith.negf %38 : vector<2x128xf32>
    %40 = math.exp %39 : vector<2x128xf32>
    %cst_18 = arith.constant 1.000000e+00 : f32
    %41 = vector.broadcast %cst_18 : f32 to vector<2x128xf32>
    %42 = arith.addf %41, %40 : vector<2x128xf32>
    %43 = arith.divf %41, %42 : vector<2x128xf32>
    %44 = math.tanh %38 : vector<2x128xf32>
    %45 = vector.extract_strided_slice %43 {offsets = [0, 0], sizes = [2, 32], strides = [1, 1]} : vector<2x128xf32> to vector<2x32xf32>
    %46 = vector.extract_strided_slice %43 {offsets = [0, 32], sizes = [2, 32], strides = [1, 1]} : vector<2x128xf32> to vector<2x32xf32>
    %47 = vector.extract_strided_slice %44 {offsets = [0, 64], sizes = [2, 32], strides = [1, 1]} : vector<2x128xf32> to vector<2x32xf32>
    %48 = vector.extract_strided_slice %43 {offsets = [0, 96], sizes = [2, 32], strides = [1, 1]} : vector<2x128xf32> to vector<2x32xf32>
    %49 = arith.mulf %46, %28 : vector<2x32xf32>
    %50 = arith.mulf %45, %47 : vector<2x32xf32>
    %51 = arith.addf %49, %50 : vector<2x32xf32>
    %52 = math.tanh %51 : vector<2x32xf32>
    %53 = arith.mulf %48, %52 : vector<2x32xf32>
    %54 = arith.index_cast %34 : i32 to index
    %c0_19 = arith.constant 0 : index
    %55 = vector.load %arg11[%54, %c0_19] : memref<16x32xf32, #tpu.memory_space<vmem>>, vector<2x32xf32>
    tpu.vector_store %arg11[%54, %c0_19], %53 {strides = array<i32>} : memref<16x32xf32, #tpu.memory_space<vmem>>, vector<2x32xf32>,
    %c2_i32_20 = arith.constant 2 : i32
    %c2_i32_21 = arith.constant 2 : i32
    %56 = arith.muli %c2_i32_20, %c2_i32_21 : i32
    %57 = tpu.assume_multiple %56, 2 : i32
    %58 = arith.index_cast %57 : i32 to index
    %c0_22 = arith.constant 0 : index
    %59 = vector.load %arg12[%58, %c0_22] : memref<16x128xf32, #tpu.memory_space<vmem>>, vector<2x128xf32>
    %cst_23 = arith.constant dense<0.000000e+00> : vector<2x128xf32>
    %60 = tpu.matmul %53, %7, %cst_23 {dimension_numbers = #tpu.dot_dimension_numbers<[1], [0], [0], [1], [0, 0, 1, 1], [], []>} : vector<2x32xf32>, vector<32x128xf32>, vector<2x128xf32> -> vector<2x128xf32>
    %61 = arith.addf %59, %60 : vector<2x128xf32>
    %62 = arith.negf %61 : vector<2x128xf32>
    %63 = math.exp %62 : vector<2x128xf32>
    %cst_24 = arith.constant 1.000000e+00 : f32
    %64 = vector.broadcast %cst_24 : f32 to vector<2x128xf32>
    %65 = arith.addf %64, %63 : vector<2x128xf32>
    %66 = arith.divf %64, %65 : vector<2x128xf32>
    %67 = math.tanh %61 : vector<2x128xf32>
    %68 = vector.extract_strided_slice %66 {offsets = [0, 0], sizes = [2, 32], strides = [1, 1]} : vector<2x128xf32> to vector<2x32xf32>
    %69 = vector.extract_strided_slice %66 {offsets = [0, 32], sizes = [2, 32], strides = [1, 1]} : vector<2x128xf32> to vector<2x32xf32>
    %70 = vector.extract_strided_slice %67 {offsets = [0, 64], sizes = [2, 32], strides = [1, 1]} : vector<2x128xf32> to vector<2x32xf32>
    %71 = vector.extract_strided_slice %66 {offsets = [0, 96], sizes = [2, 32], strides = [1, 1]} : vector<2x128xf32> to vector<2x32xf32>
    %72 = arith.mulf %69, %51 : vector<2x32xf32>
    %73 = arith.mulf %68, %70 : vector<2x32xf32>
    %74 = arith.addf %72, %73 : vector<2x32xf32>
    %75 = math.tanh %74 : vector<2x32xf32>
    %76 = arith.mulf %71, %75 : vector<2x32xf32>
    %77 = arith.index_cast %57 : i32 to index
    %c0_25 = arith.constant 0 : index
    %78 = vector.load %arg11[%77, %c0_25] : memref<16x32xf32, #tpu.memory_space<vmem>>, vector<2x32xf32>
    tpu.vector_store %arg11[%77, %c0_25], %76 {strides = array<i32>} : memref<16x32xf32, #tpu.memory_space<vmem>>, vector<2x32xf32>,
    %c3_i32 = arith.constant 3 : i32
    %c2_i32_26 = arith.constant 2 : i32
    %79 = arith.muli %c3_i32, %c2_i32_26 : i32
    %80 = tpu.assume_multiple %79, 2 : i32
    %81 = arith.index_cast %80 : i32 to index
    %c0_27 = arith.constant 0 : index
    %82 = vector.load %arg12[%81, %c0_27] : memref<16x128xf32, #tpu.memory_space<vmem>>, vector<2x128xf32>
    %cst_28 = arith.constant dense<0.000000e+00> : vector<2x128xf32>
    %83 = tpu.matmul %76, %7, %cst_28 {dimension_numbers = #tpu.dot_dimension_numbers<[1], [0], [0], [1], [0, 0, 1, 1], [], []>} : vector<2x32xf32>, vector<32x128xf32>, vector<2x128xf32> -> vector<2x128xf32>
    %84 = arith.addf %82, %83 : vector<2x128xf32>
    %85 = arith.negf %84 : vector<2x128xf32>
    %86 = math.exp %85 : vector<2x128xf32>
    %cst_29 = arith.constant 1.000000e+00 : f32
    %87 = vector.broadcast %cst_29 : f32 to vector<2x128xf32>
    %88 = arith.addf %87, %86 : vector<2x128xf32>
    %89 = arith.divf %87, %88 : vector<2x128xf32>
    %90 = math.tanh %84 : vector<2x128xf32>
    %91 = vector.extract_strided_slice %89 {offsets = [0, 0], sizes = [2, 32], strides = [1, 1]} : vector<2x128xf32> to vector<2x32xf32>
    %92 = vector.extract_strided_slice %89 {offsets = [0, 32], sizes = [2, 32], strides = [1, 1]} : vector<2x128xf32> to vector<2x32xf32>
    %93 = vector.extract_strided_slice %90 {offsets = [0, 64], sizes = [2, 32], strides = [1, 1]} : vector<2x128xf32> to vector<2x32xf32>
    %94 = vector.extract_strided_slice %89 {offsets = [0, 96], sizes = [2, 32], strides = [1, 1]} : vector<2x128xf32> to vector<2x32xf32>
    %95 = arith.mulf %92, %74 : vector<2x32xf32>
    %96 = arith.mulf %91, %93 : vector<2x32xf32>
    %97 = arith.addf %95, %96 : vector<2x32xf32>
    %98 = math.tanh %97 : vector<2x32xf32>
    %99 = arith.mulf %94, %98 : vector<2x32xf32>
    %100 = arith.index_cast %80 : i32 to index
    %c0_30 = arith.constant 0 : index
    %101 = vector.load %arg11[%100, %c0_30] : memref<16x32xf32, #tpu.memory_space<vmem>>, vector<2x32xf32>
    tpu.vector_store %arg11[%100, %c0_30], %99 {strides = array<i32>} : memref<16x32xf32, #tpu.memory_space<vmem>>, vector<2x32xf32>,
    %c4_i32 = arith.constant 4 : i32
    %c2_i32_31 = arith.constant 2 : i32
    %102 = arith.muli %c4_i32, %c2_i32_31 : i32
    %103 = tpu.assume_multiple %102, 2 : i32
    %104 = arith.index_cast %103 : i32 to index
    %c0_32 = arith.constant 0 : index
    %105 = vector.load %arg12[%104, %c0_32] : memref<16x128xf32, #tpu.memory_space<vmem>>, vector<2x128xf32>
    %cst_33 = arith.constant dense<0.000000e+00> : vector<2x128xf32>
    %106 = tpu.matmul %99, %7, %cst_33 {dimension_numbers = #tpu.dot_dimension_numbers<[1], [0], [0], [1], [0, 0, 1, 1], [], []>} : vector<2x32xf32>, vector<32x128xf32>, vector<2x128xf32> -> vector<2x128xf32>
    %107 = arith.addf %105, %106 : vector<2x128xf32>
    %108 = arith.negf %107 : vector<2x128xf32>
    %109 = math.exp %108 : vector<2x128xf32>
    %cst_34 = arith.constant 1.000000e+00 : f32
    %110 = vector.broadcast %cst_34 : f32 to vector<2x128xf32>
    %111 = arith.addf %110, %109 : vector<2x128xf32>
    %112 = arith.divf %110, %111 : vector<2x128xf32>
    %113 = math.tanh %107 : vector<2x128xf32>
    %114 = vector.extract_strided_slice %112 {offsets = [0, 0], sizes = [2, 32], strides = [1, 1]} : vector<2x128xf32> to vector<2x32xf32>
    %115 = vector.extract_strided_slice %112 {offsets = [0, 32], sizes = [2, 32], strides = [1, 1]} : vector<2x128xf32> to vector<2x32xf32>
    %116 = vector.extract_strided_slice %113 {offsets = [0, 64], sizes = [2, 32], strides = [1, 1]} : vector<2x128xf32> to vector<2x32xf32>
    %117 = vector.extract_strided_slice %112 {offsets = [0, 96], sizes = [2, 32], strides = [1, 1]} : vector<2x128xf32> to vector<2x32xf32>
    %118 = arith.mulf %115, %97 : vector<2x32xf32>
    %119 = arith.mulf %114, %116 : vector<2x32xf32>
    %120 = arith.addf %118, %119 : vector<2x32xf32>
    %121 = math.tanh %120 : vector<2x32xf32>
    %122 = arith.mulf %117, %121 : vector<2x32xf32>
    %123 = arith.index_cast %103 : i32 to index
    %c0_35 = arith.constant 0 : index
    %124 = vector.load %arg11[%123, %c0_35] : memref<16x32xf32, #tpu.memory_space<vmem>>, vector<2x32xf32>
    tpu.vector_store %arg11[%123, %c0_35], %122 {strides = array<i32>} : memref<16x32xf32, #tpu.memory_space<vmem>>, vector<2x32xf32>,
    %c5_i32 = arith.constant 5 : i32
    %c2_i32_36 = arith.constant 2 : i32
    %125 = arith.muli %c5_i32, %c2_i32_36 : i32
    %126 = tpu.assume_multiple %125, 2 : i32
    %127 = arith.index_cast %126 : i32 to index
    %c0_37 = arith.constant 0 : index
    %128 = vector.load %arg12[%127, %c0_37] : memref<16x128xf32, #tpu.memory_space<vmem>>, vector<2x128xf32>
    %cst_38 = arith.constant dense<0.000000e+00> : vector<2x128xf32>
    %129 = tpu.matmul %122, %7, %cst_38 {dimension_numbers = #tpu.dot_dimension_numbers<[1], [0], [0], [1], [0, 0, 1, 1], [], []>} : vector<2x32xf32>, vector<32x128xf32>, vector<2x128xf32> -> vector<2x128xf32>
    %130 = arith.addf %128, %129 : vector<2x128xf32>
    %131 = arith.negf %130 : vector<2x128xf32>
    %132 = math.exp %131 : vector<2x128xf32>
    %cst_39 = arith.constant 1.000000e+00 : f32
    %133 = vector.broadcast %cst_39 : f32 to vector<2x128xf32>
    %134 = arith.addf %133, %132 : vector<2x128xf32>
    %135 = arith.divf %133, %134 : vector<2x128xf32>
    %136 = math.tanh %130 : vector<2x128xf32>
    %137 = vector.extract_strided_slice %135 {offsets = [0, 0], sizes = [2, 32], strides = [1, 1]} : vector<2x128xf32> to vector<2x32xf32>
    %138 = vector.extract_strided_slice %135 {offsets = [0, 32], sizes = [2, 32], strides = [1, 1]} : vector<2x128xf32> to vector<2x32xf32>
    %139 = vector.extract_strided_slice %136 {offsets = [0, 64], sizes = [2, 32], strides = [1, 1]} : vector<2x128xf32> to vector<2x32xf32>
    %140 = vector.extract_strided_slice %135 {offsets = [0, 96], sizes = [2, 32], strides = [1, 1]} : vector<2x128xf32> to vector<2x32xf32>
    %141 = arith.mulf %138, %120 : vector<2x32xf32>
    %142 = arith.mulf %137, %139 : vector<2x32xf32>
    %143 = arith.addf %141, %142 : vector<2x32xf32>
    %144 = math.tanh %143 : vector<2x32xf32>
    %145 = arith.mulf %140, %144 : vector<2x32xf32>
    %146 = arith.index_cast %126 : i32 to index
    %c0_40 = arith.constant 0 : index
    %147 = vector.load %arg11[%146, %c0_40] : memref<16x32xf32, #tpu.memory_space<vmem>>, vector<2x32xf32>
    tpu.vector_store %arg11[%146, %c0_40], %145 {strides = array<i32>} : memref<16x32xf32, #tpu.memory_space<vmem>>, vector<2x32xf32>,
    %c6_i32 = arith.constant 6 : i32
    %c2_i32_41 = arith.constant 2 : i32
    %148 = arith.muli %c6_i32, %c2_i32_41 : i32
    %149 = tpu.assume_multiple %148, 2 : i32
    %150 = arith.index_cast %149 : i32 to index
    %c0_42 = arith.constant 0 : index
    %151 = vector.load %arg12[%150, %c0_42] : memref<16x128xf32, #tpu.memory_space<vmem>>, vector<2x128xf32>
    %cst_43 = arith.constant dense<0.000000e+00> : vector<2x128xf32>
    %152 = tpu.matmul %145, %7, %cst_43 {dimension_numbers = #tpu.dot_dimension_numbers<[1], [0], [0], [1], [0, 0, 1, 1], [], []>} : vector<2x32xf32>, vector<32x128xf32>, vector<2x128xf32> -> vector<2x128xf32>
    %153 = arith.addf %151, %152 : vector<2x128xf32>
    %154 = arith.negf %153 : vector<2x128xf32>
    %155 = math.exp %154 : vector<2x128xf32>
    %cst_44 = arith.constant 1.000000e+00 : f32
    %156 = vector.broadcast %cst_44 : f32 to vector<2x128xf32>
    %157 = arith.addf %156, %155 : vector<2x128xf32>
    %158 = arith.divf %156, %157 : vector<2x128xf32>
    %159 = math.tanh %153 : vector<2x128xf32>
    %160 = vector.extract_strided_slice %158 {offsets = [0, 0], sizes = [2, 32], strides = [1, 1]} : vector<2x128xf32> to vector<2x32xf32>
    %161 = vector.extract_strided_slice %158 {offsets = [0, 32], sizes = [2, 32], strides = [1, 1]} : vector<2x128xf32> to vector<2x32xf32>
    %162 = vector.extract_strided_slice %159 {offsets = [0, 64], sizes = [2, 32], strides = [1, 1]} : vector<2x128xf32> to vector<2x32xf32>
    %163 = vector.extract_strided_slice %158 {offsets = [0, 96], sizes = [2, 32], strides = [1, 1]} : vector<2x128xf32> to vector<2x32xf32>
    %164 = arith.mulf %161, %143 : vector<2x32xf32>
    %165 = arith.mulf %160, %162 : vector<2x32xf32>
    %166 = arith.addf %164, %165 : vector<2x32xf32>
    %167 = math.tanh %166 : vector<2x32xf32>
    %168 = arith.mulf %163, %167 : vector<2x32xf32>
    %169 = arith.index_cast %149 : i32 to index
    %c0_45 = arith.constant 0 : index
    %170 = vector.load %arg11[%169, %c0_45] : memref<16x32xf32, #tpu.memory_space<vmem>>, vector<2x32xf32>
    tpu.vector_store %arg11[%169, %c0_45], %168 {strides = array<i32>} : memref<16x32xf32, #tpu.memory_space<vmem>>, vector<2x32xf32>,
    %c7_i32 = arith.constant 7 : i32
    %c2_i32_46 = arith.constant 2 : i32
    %171 = arith.muli %c7_i32, %c2_i32_46 : i32
    %172 = tpu.assume_multiple %171, 2 : i32
    %173 = arith.index_cast %172 : i32 to index
    %c0_47 = arith.constant 0 : index
    %174 = vector.load %arg12[%173, %c0_47] : memref<16x128xf32, #tpu.memory_space<vmem>>, vector<2x128xf32>
    %cst_48 = arith.constant dense<0.000000e+00> : vector<2x128xf32>
    %175 = tpu.matmul %168, %7, %cst_48 {dimension_numbers = #tpu.dot_dimension_numbers<[1], [0], [0], [1], [0, 0, 1, 1], [], []>} : vector<2x32xf32>, vector<32x128xf32>, vector<2x128xf32> -> vector<2x128xf32>
    %176 = arith.addf %174, %175 : vector<2x128xf32>
    %177 = arith.negf %176 : vector<2x128xf32>
    %178 = math.exp %177 : vector<2x128xf32>
    %cst_49 = arith.constant 1.000000e+00 : f32
    %179 = vector.broadcast %cst_49 : f32 to vector<2x128xf32>
    %180 = arith.addf %179, %178 : vector<2x128xf32>
    %181 = arith.divf %179, %180 : vector<2x128xf32>
    %182 = math.tanh %176 : vector<2x128xf32>
    %183 = vector.extract_strided_slice %181 {offsets = [0, 0], sizes = [2, 32], strides = [1, 1]} : vector<2x128xf32> to vector<2x32xf32>
    %184 = vector.extract_strided_slice %181 {offsets = [0, 32], sizes = [2, 32], strides = [1, 1]} : vector<2x128xf32> to vector<2x32xf32>
    %185 = vector.extract_strided_slice %182 {offsets = [0, 64], sizes = [2, 32], strides = [1, 1]} : vector<2x128xf32> to vector<2x32xf32>
    %186 = vector.extract_strided_slice %181 {offsets = [0, 96], sizes = [2, 32], strides = [1, 1]} : vector<2x128xf32> to vector<2x32xf32>
    %187 = arith.mulf %184, %166 : vector<2x32xf32>
    %188 = arith.mulf %183, %185 : vector<2x32xf32>
    %189 = arith.addf %187, %188 : vector<2x32xf32>
    %190 = math.tanh %189 : vector<2x32xf32>
    %191 = arith.mulf %186, %190 : vector<2x32xf32>
    %192 = arith.index_cast %172 : i32 to index
    %c0_50 = arith.constant 0 : index
    %193 = vector.load %arg11[%192, %c0_50] : memref<16x32xf32, #tpu.memory_space<vmem>>, vector<2x32xf32>
    tpu.vector_store %arg11[%192, %c0_50], %191 {strides = array<i32>} : memref<16x32xf32, #tpu.memory_space<vmem>>, vector<2x32xf32>,
    %c8_i32 = arith.constant 8 : i32
    %c0_51 = arith.constant 0 : index
    %c0_52 = arith.constant 0 : index
    %194 = vector.load %arg11[%c0_51, %c0_52] : memref<16x32xf32, #tpu.memory_space<vmem>>, vector<16x32xf32>
    %c0_53 = arith.constant 0 : index
    %c0_54 = arith.constant 0 : index
    %195 = vector.load %arg5[%c0_53, %c0_54] : memref<32x128xf32, #tpu.memory_space<vmem>>, vector<32x128xf32>
    %cst_55 = arith.constant dense<0.000000e+00> : vector<16x128xf32>
    %196 = tpu.matmul %194, %195, %cst_55 {dimension_numbers = #tpu.dot_dimension_numbers<[1], [0], [0], [1], [0, 0, 1, 1], [], []>} : vector<16x32xf32>, vector<32x128xf32>, vector<16x128xf32> -> vector<16x128xf32>
    %c0_56 = arith.constant 0 : index
    %c0_57 = arith.constant 0 : index
    %197 = vector.load %arg7[%c0_56, %c0_57] : memref<1x128xf32, #tpu.memory_space<vmem>>, vector<1x128xf32>
    %198 = vector.broadcast %197 : vector<1x128xf32> to vector<16x128xf32>
    %199 = arith.addf %196, %198 : vector<16x128xf32>
    %c0_58 = arith.constant 0 : index
    %c0_59 = arith.constant 0 : index
    %200 = vector.load %arg12[%c0_58, %c0_59] : memref<16x128xf32, #tpu.memory_space<vmem>>, vector<16x128xf32>
    tpu.vector_store %arg12[%c0_58, %c0_59], %199 {strides = array<i32>} : memref<16x128xf32, #tpu.memory_space<vmem>>, vector<16x128xf32>,
    %c0_60 = arith.constant 0 : index
    %c0_61 = arith.constant 0 : index
    %201 = vector.load %arg6[%c0_60, %c0_61] : memref<32x128xf32, #tpu.memory_space<vmem>>, vector<32x128xf32>
    %cst_62 = arith.constant 0.000000e+00 : f32
    %202 = vector.broadcast %cst_62 : f32 to vector<2x32xf32>
    %cst_63 = arith.constant 0.000000e+00 : f32
    %203 = vector.broadcast %cst_63 : f32 to vector<2x32xf32>
    %c0_i32_64 = arith.constant 0 : i32
    %c2_i32_65 = arith.constant 2 : i32
    %204 = arith.muli %c0_i32_64, %c2_i32_65 : i32
    %205 = tpu.assume_multiple %204, 2 : i32
    %206 = arith.index_cast %205 : i32 to index
    %c0_66 = arith.constant 0 : index
    %207 = vector.load %arg12[%206, %c0_66] : memref<16x128xf32, #tpu.memory_space<vmem>>, vector<2x128xf32>
    %cst_67 = arith.constant dense<0.000000e+00> : vector<2x128xf32>
    %208 = tpu.matmul %202, %201, %cst_67 {dimension_numbers = #tpu.dot_dimension_numbers<[1], [0], [0], [1], [0, 0, 1, 1], [], []>} : vector<2x32xf32>, vector<32x128xf32>, vector<2x128xf32> -> vector<2x128xf32>
    %209 = arith.addf %207, %208 : vector<2x128xf32>
    %210 = arith.negf %209 : vector<2x128xf32>
    %211 = math.exp %210 : vector<2x128xf32>
    %cst_68 = arith.constant 1.000000e+00 : f32
    %212 = vector.broadcast %cst_68 : f32 to vector<2x128xf32>
    %213 = arith.addf %212, %211 : vector<2x128xf32>
    %214 = arith.divf %212, %213 : vector<2x128xf32>
    %215 = math.tanh %209 : vector<2x128xf32>
    %216 = vector.extract_strided_slice %214 {offsets = [0, 0], sizes = [2, 32], strides = [1, 1]} : vector<2x128xf32> to vector<2x32xf32>
    %217 = vector.extract_strided_slice %214 {offsets = [0, 32], sizes = [2, 32], strides = [1, 1]} : vector<2x128xf32> to vector<2x32xf32>
    %218 = vector.extract_strided_slice %215 {offsets = [0, 64], sizes = [2, 32], strides = [1, 1]} : vector<2x128xf32> to vector<2x32xf32>
    %219 = vector.extract_strided_slice %214 {offsets = [0, 96], sizes = [2, 32], strides = [1, 1]} : vector<2x128xf32> to vector<2x32xf32>
    %220 = arith.mulf %217, %203 : vector<2x32xf32>
    %221 = arith.mulf %216, %218 : vector<2x32xf32>
    %222 = arith.addf %220, %221 : vector<2x32xf32>
    %223 = math.tanh %222 : vector<2x32xf32>
    %224 = arith.mulf %219, %223 : vector<2x32xf32>
    %c1_i32_69 = arith.constant 1 : i32
    %c2_i32_70 = arith.constant 2 : i32
    %225 = arith.muli %c1_i32_69, %c2_i32_70 : i32
    %226 = tpu.assume_multiple %225, 2 : i32
    %227 = arith.index_cast %226 : i32 to index
    %c0_71 = arith.constant 0 : index
    %228 = vector.load %arg12[%227, %c0_71] : memref<16x128xf32, #tpu.memory_space<vmem>>, vector<2x128xf32>
    %cst_72 = arith.constant dense<0.000000e+00> : vector<2x128xf32>
    %229 = tpu.matmul %224, %201, %cst_72 {dimension_numbers = #tpu.dot_dimension_numbers<[1], [0], [0], [1], [0, 0, 1, 1], [], []>} : vector<2x32xf32>, vector<32x128xf32>, vector<2x128xf32> -> vector<2x128xf32>
    %230 = arith.addf %228, %229 : vector<2x128xf32>
    %231 = arith.negf %230 : vector<2x128xf32>
    %232 = math.exp %231 : vector<2x128xf32>
    %cst_73 = arith.constant 1.000000e+00 : f32
    %233 = vector.broadcast %cst_73 : f32 to vector<2x128xf32>
    %234 = arith.addf %233, %232 : vector<2x128xf32>
    %235 = arith.divf %233, %234 : vector<2x128xf32>
    %236 = math.tanh %230 : vector<2x128xf32>
    %237 = vector.extract_strided_slice %235 {offsets = [0, 0], sizes = [2, 32], strides = [1, 1]} : vector<2x128xf32> to vector<2x32xf32>
    %238 = vector.extract_strided_slice %235 {offsets = [0, 32], sizes = [2, 32], strides = [1, 1]} : vector<2x128xf32> to vector<2x32xf32>
    %239 = vector.extract_strided_slice %236 {offsets = [0, 64], sizes = [2, 32], strides = [1, 1]} : vector<2x128xf32> to vector<2x32xf32>
    %240 = vector.extract_strided_slice %235 {offsets = [0, 96], sizes = [2, 32], strides = [1, 1]} : vector<2x128xf32> to vector<2x32xf32>
    %241 = arith.mulf %238, %222 : vector<2x32xf32>
    %242 = arith.mulf %237, %239 : vector<2x32xf32>
    %243 = arith.addf %241, %242 : vector<2x32xf32>
    %244 = math.tanh %243 : vector<2x32xf32>
    %245 = arith.mulf %240, %244 : vector<2x32xf32>
    %c2_i32_74 = arith.constant 2 : i32
    %c2_i32_75 = arith.constant 2 : i32
    %246 = arith.muli %c2_i32_74, %c2_i32_75 : i32
    %247 = tpu.assume_multiple %246, 2 : i32
    %248 = arith.index_cast %247 : i32 to index
    %c0_76 = arith.constant 0 : index
    %249 = vector.load %arg12[%248, %c0_76] : memref<16x128xf32, #tpu.memory_space<vmem>>, vector<2x128xf32>
    %cst_77 = arith.constant dense<0.000000e+00> : vector<2x128xf32>
    %250 = tpu.matmul %245, %201, %cst_77 {dimension_numbers = #tpu.dot_dimension_numbers<[1], [0], [0], [1], [0, 0, 1, 1], [], []>} : vector<2x32xf32>, vector<32x128xf32>, vector<2x128xf32> -> vector<2x128xf32>
    %251 = arith.addf %249, %250 : vector<2x128xf32>
    %252 = arith.negf %251 : vector<2x128xf32>
    %253 = math.exp %252 : vector<2x128xf32>
    %cst_78 = arith.constant 1.000000e+00 : f32
    %254 = vector.broadcast %cst_78 : f32 to vector<2x128xf32>
    %255 = arith.addf %254, %253 : vector<2x128xf32>
    %256 = arith.divf %254, %255 : vector<2x128xf32>
    %257 = math.tanh %251 : vector<2x128xf32>
    %258 = vector.extract_strided_slice %256 {offsets = [0, 0], sizes = [2, 32], strides = [1, 1]} : vector<2x128xf32> to vector<2x32xf32>
    %259 = vector.extract_strided_slice %256 {offsets = [0, 32], sizes = [2, 32], strides = [1, 1]} : vector<2x128xf32> to vector<2x32xf32>
    %260 = vector.extract_strided_slice %257 {offsets = [0, 64], sizes = [2, 32], strides = [1, 1]} : vector<2x128xf32> to vector<2x32xf32>
    %261 = vector.extract_strided_slice %256 {offsets = [0, 96], sizes = [2, 32], strides = [1, 1]} : vector<2x128xf32> to vector<2x32xf32>
    %262 = arith.mulf %259, %243 : vector<2x32xf32>
    %263 = arith.mulf %258, %260 : vector<2x32xf32>
    %264 = arith.addf %262, %263 : vector<2x32xf32>
    %265 = math.tanh %264 : vector<2x32xf32>
    %266 = arith.mulf %261, %265 : vector<2x32xf32>
    %c3_i32_79 = arith.constant 3 : i32
    %c2_i32_80 = arith.constant 2 : i32
    %267 = arith.muli %c3_i32_79, %c2_i32_80 : i32
    %268 = tpu.assume_multiple %267, 2 : i32
    %269 = arith.index_cast %268 : i32 to index
    %c0_81 = arith.constant 0 : index
    %270 = vector.load %arg12[%269, %c0_81] : memref<16x128xf32, #tpu.memory_space<vmem>>, vector<2x128xf32>
    %cst_82 = arith.constant dense<0.000000e+00> : vector<2x128xf32>
    %271 = tpu.matmul %266, %201, %cst_82 {dimension_numbers = #tpu.dot_dimension_numbers<[1], [0], [0], [1], [0, 0, 1, 1], [], []>} : vector<2x32xf32>, vector<32x128xf32>, vector<2x128xf32> -> vector<2x128xf32>
    %272 = arith.addf %270, %271 : vector<2x128xf32>
    %273 = arith.negf %272 : vector<2x128xf32>
    %274 = math.exp %273 : vector<2x128xf32>
    %cst_83 = arith.constant 1.000000e+00 : f32
    %275 = vector.broadcast %cst_83 : f32 to vector<2x128xf32>
    %276 = arith.addf %275, %274 : vector<2x128xf32>
    %277 = arith.divf %275, %276 : vector<2x128xf32>
    %278 = math.tanh %272 : vector<2x128xf32>
    %279 = vector.extract_strided_slice %277 {offsets = [0, 0], sizes = [2, 32], strides = [1, 1]} : vector<2x128xf32> to vector<2x32xf32>
    %280 = vector.extract_strided_slice %277 {offsets = [0, 32], sizes = [2, 32], strides = [1, 1]} : vector<2x128xf32> to vector<2x32xf32>
    %281 = vector.extract_strided_slice %278 {offsets = [0, 64], sizes = [2, 32], strides = [1, 1]} : vector<2x128xf32> to vector<2x32xf32>
    %282 = vector.extract_strided_slice %277 {offsets = [0, 96], sizes = [2, 32], strides = [1, 1]} : vector<2x128xf32> to vector<2x32xf32>
    %283 = arith.mulf %280, %264 : vector<2x32xf32>
    %284 = arith.mulf %279, %281 : vector<2x32xf32>
    %285 = arith.addf %283, %284 : vector<2x32xf32>
    %286 = math.tanh %285 : vector<2x32xf32>
    %287 = arith.mulf %282, %286 : vector<2x32xf32>
    %c4_i32_84 = arith.constant 4 : i32
    %c2_i32_85 = arith.constant 2 : i32
    %288 = arith.muli %c4_i32_84, %c2_i32_85 : i32
    %289 = tpu.assume_multiple %288, 2 : i32
    %290 = arith.index_cast %289 : i32 to index
    %c0_86 = arith.constant 0 : index
    %291 = vector.load %arg12[%290, %c0_86] : memref<16x128xf32, #tpu.memory_space<vmem>>, vector<2x128xf32>
    %cst_87 = arith.constant dense<0.000000e+00> : vector<2x128xf32>
    %292 = tpu.matmul %287, %201, %cst_87 {dimension_numbers = #tpu.dot_dimension_numbers<[1], [0], [0], [1], [0, 0, 1, 1], [], []>} : vector<2x32xf32>, vector<32x128xf32>, vector<2x128xf32> -> vector<2x128xf32>
    %293 = arith.addf %291, %292 : vector<2x128xf32>
    %294 = arith.negf %293 : vector<2x128xf32>
    %295 = math.exp %294 : vector<2x128xf32>
    %cst_88 = arith.constant 1.000000e+00 : f32
    %296 = vector.broadcast %cst_88 : f32 to vector<2x128xf32>
    %297 = arith.addf %296, %295 : vector<2x128xf32>
    %298 = arith.divf %296, %297 : vector<2x128xf32>
    %299 = math.tanh %293 : vector<2x128xf32>
    %300 = vector.extract_strided_slice %298 {offsets = [0, 0], sizes = [2, 32], strides = [1, 1]} : vector<2x128xf32> to vector<2x32xf32>
    %301 = vector.extract_strided_slice %298 {offsets = [0, 32], sizes = [2, 32], strides = [1, 1]} : vector<2x128xf32> to vector<2x32xf32>
    %302 = vector.extract_strided_slice %299 {offsets = [0, 64], sizes = [2, 32], strides = [1, 1]} : vector<2x128xf32> to vector<2x32xf32>
    %303 = vector.extract_strided_slice %298 {offsets = [0, 96], sizes = [2, 32], strides = [1, 1]} : vector<2x128xf32> to vector<2x32xf32>
    %304 = arith.mulf %301, %285 : vector<2x32xf32>
    %305 = arith.mulf %300, %302 : vector<2x32xf32>
    %306 = arith.addf %304, %305 : vector<2x32xf32>
    %307 = math.tanh %306 : vector<2x32xf32>
    %308 = arith.mulf %303, %307 : vector<2x32xf32>
    %c5_i32_89 = arith.constant 5 : i32
    %c2_i32_90 = arith.constant 2 : i32
    %309 = arith.muli %c5_i32_89, %c2_i32_90 : i32
    %310 = tpu.assume_multiple %309, 2 : i32
    %311 = arith.index_cast %310 : i32 to index
    %c0_91 = arith.constant 0 : index
    %312 = vector.load %arg12[%311, %c0_91] : memref<16x128xf32, #tpu.memory_space<vmem>>, vector<2x128xf32>
    %cst_92 = arith.constant dense<0.000000e+00> : vector<2x128xf32>
    %313 = tpu.matmul %308, %201, %cst_92 {dimension_numbers = #tpu.dot_dimension_numbers<[1], [0], [0], [1], [0, 0, 1, 1], [], []>} : vector<2x32xf32>, vector<32x128xf32>, vector<2x128xf32> -> vector<2x128xf32>
    %314 = arith.addf %312, %313 : vector<2x128xf32>
    %315 = arith.negf %314 : vector<2x128xf32>
    %316 = math.exp %315 : vector<2x128xf32>
    %cst_93 = arith.constant 1.000000e+00 : f32
    %317 = vector.broadcast %cst_93 : f32 to vector<2x128xf32>
    %318 = arith.addf %317, %316 : vector<2x128xf32>
    %319 = arith.divf %317, %318 : vector<2x128xf32>
    %320 = math.tanh %314 : vector<2x128xf32>
    %321 = vector.extract_strided_slice %319 {offsets = [0, 0], sizes = [2, 32], strides = [1, 1]} : vector<2x128xf32> to vector<2x32xf32>
    %322 = vector.extract_strided_slice %319 {offsets = [0, 32], sizes = [2, 32], strides = [1, 1]} : vector<2x128xf32> to vector<2x32xf32>
    %323 = vector.extract_strided_slice %320 {offsets = [0, 64], sizes = [2, 32], strides = [1, 1]} : vector<2x128xf32> to vector<2x32xf32>
    %324 = vector.extract_strided_slice %319 {offsets = [0, 96], sizes = [2, 32], strides = [1, 1]} : vector<2x128xf32> to vector<2x32xf32>
    %325 = arith.mulf %322, %306 : vector<2x32xf32>
    %326 = arith.mulf %321, %323 : vector<2x32xf32>
    %327 = arith.addf %325, %326 : vector<2x32xf32>
    %328 = math.tanh %327 : vector<2x32xf32>
    %329 = arith.mulf %324, %328 : vector<2x32xf32>
    %c6_i32_94 = arith.constant 6 : i32
    %c2_i32_95 = arith.constant 2 : i32
    %330 = arith.muli %c6_i32_94, %c2_i32_95 : i32
    %331 = tpu.assume_multiple %330, 2 : i32
    %332 = arith.index_cast %331 : i32 to index
    %c0_96 = arith.constant 0 : index
    %333 = vector.load %arg12[%332, %c0_96] : memref<16x128xf32, #tpu.memory_space<vmem>>, vector<2x128xf32>
    %cst_97 = arith.constant dense<0.000000e+00> : vector<2x128xf32>
    %334 = tpu.matmul %329, %201, %cst_97 {dimension_numbers = #tpu.dot_dimension_numbers<[1], [0], [0], [1], [0, 0, 1, 1], [], []>} : vector<2x32xf32>, vector<32x128xf32>, vector<2x128xf32> -> vector<2x128xf32>
    %335 = arith.addf %333, %334 : vector<2x128xf32>
    %336 = arith.negf %335 : vector<2x128xf32>
    %337 = math.exp %336 : vector<2x128xf32>
    %cst_98 = arith.constant 1.000000e+00 : f32
    %338 = vector.broadcast %cst_98 : f32 to vector<2x128xf32>
    %339 = arith.addf %338, %337 : vector<2x128xf32>
    %340 = arith.divf %338, %339 : vector<2x128xf32>
    %341 = math.tanh %335 : vector<2x128xf32>
    %342 = vector.extract_strided_slice %340 {offsets = [0, 0], sizes = [2, 32], strides = [1, 1]} : vector<2x128xf32> to vector<2x32xf32>
    %343 = vector.extract_strided_slice %340 {offsets = [0, 32], sizes = [2, 32], strides = [1, 1]} : vector<2x128xf32> to vector<2x32xf32>
    %344 = vector.extract_strided_slice %341 {offsets = [0, 64], sizes = [2, 32], strides = [1, 1]} : vector<2x128xf32> to vector<2x32xf32>
    %345 = vector.extract_strided_slice %340 {offsets = [0, 96], sizes = [2, 32], strides = [1, 1]} : vector<2x128xf32> to vector<2x32xf32>
    %346 = arith.mulf %343, %327 : vector<2x32xf32>
    %347 = arith.mulf %342, %344 : vector<2x32xf32>
    %348 = arith.addf %346, %347 : vector<2x32xf32>
    %349 = math.tanh %348 : vector<2x32xf32>
    %350 = arith.mulf %345, %349 : vector<2x32xf32>
    %c7_i32_99 = arith.constant 7 : i32
    %c2_i32_100 = arith.constant 2 : i32
    %351 = arith.muli %c7_i32_99, %c2_i32_100 : i32
    %352 = tpu.assume_multiple %351, 2 : i32
    %353 = arith.index_cast %352 : i32 to index
    %c0_101 = arith.constant 0 : index
    %354 = vector.load %arg12[%353, %c0_101] : memref<16x128xf32, #tpu.memory_space<vmem>>, vector<2x128xf32>
    %cst_102 = arith.constant dense<0.000000e+00> : vector<2x128xf32>
    %355 = tpu.matmul %350, %201, %cst_102 {dimension_numbers = #tpu.dot_dimension_numbers<[1], [0], [0], [1], [0, 0, 1, 1], [], []>} : vector<2x32xf32>, vector<32x128xf32>, vector<2x128xf32> -> vector<2x128xf32>
    %356 = arith.addf %354, %355 : vector<2x128xf32>
    %357 = arith.negf %356 : vector<2x128xf32>
    %358 = math.exp %357 : vector<2x128xf32>
    %cst_103 = arith.constant 1.000000e+00 : f32
    %359 = vector.broadcast %cst_103 : f32 to vector<2x128xf32>
    %360 = arith.addf %359, %358 : vector<2x128xf32>
    %361 = arith.divf %359, %360 : vector<2x128xf32>
    %362 = math.tanh %356 : vector<2x128xf32>
    %363 = vector.extract_strided_slice %361 {offsets = [0, 0], sizes = [2, 32], strides = [1, 1]} : vector<2x128xf32> to vector<2x32xf32>
    %364 = vector.extract_strided_slice %361 {offsets = [0, 32], sizes = [2, 32], strides = [1, 1]} : vector<2x128xf32> to vector<2x32xf32>
    %365 = vector.extract_strided_slice %362 {offsets = [0, 64], sizes = [2, 32], strides = [1, 1]} : vector<2x128xf32> to vector<2x32xf32>
    %366 = vector.extract_strided_slice %361 {offsets = [0, 96], sizes = [2, 32], strides = [1, 1]} : vector<2x128xf32> to vector<2x32xf32>
    %367 = arith.mulf %364, %348 : vector<2x32xf32>
    %368 = arith.mulf %363, %365 : vector<2x32xf32>
    %369 = arith.addf %367, %368 : vector<2x32xf32>
    %370 = math.tanh %369 : vector<2x32xf32>
    %371 = arith.mulf %366, %370 : vector<2x32xf32>
    %c8_i32_104 = arith.constant 8 : i32
    %c0_105 = arith.constant 0 : index
    %c0_106 = arith.constant 0 : index
    %372 = vector.load %arg8[%c0_105, %c0_106] : memref<32x4xf32, #tpu.memory_space<vmem>>, vector<32x4xf32>
    %cst_107 = arith.constant dense<0.000000e+00> : vector<2x4xf32>
    %373 = tpu.matmul %371, %372, %cst_107 {dimension_numbers = #tpu.dot_dimension_numbers<[1], [0], [0], [1], [0, 0, 1, 1], [], []>} : vector<2x32xf32>, vector<32x4xf32>, vector<2x4xf32> -> vector<2x4xf32>
    %c0_108 = arith.constant 0 : index
    %c0_109 = arith.constant 0 : index
    %374 = vector.load %arg9[%c0_108, %c0_109] : memref<1x4xf32, #tpu.memory_space<vmem>>, vector<1x4xf32>
    %375 = vector.broadcast %374 : vector<1x4xf32> to vector<2x4xf32>
    %376 = arith.addf %373, %375 : vector<2x4xf32>
    %c0_110 = arith.constant 0 : index
    %c0_111 = arith.constant 0 : index
    %377 = vector.load %arg10[%c0_110, %c0_111] : memref<2x4xf32, #tpu.memory_space<vmem>>, vector<2x4xf32>
    tpu.vector_store %arg10[%c0_110, %c0_111], %376 {strides = array<i32>} : memref<2x4xf32, #tpu.memory_space<vmem>>, vector<2x4xf32>,
    return
  }
  func.func @transform_0(%arg0: i32) -> (i32, i32) {
    %c0_i32 = arith.constant 0 : i32
    %c0_i32_0 = arith.constant 0 : i32
    %c0_i32_1 = arith.constant 0 : i32
    return %c0_i32, %c0_i32_0 : i32, i32
  }
  func.func @transform_1(%arg0: i32) -> (i32, i32) {
    %c0_i32 = arith.constant 0 : i32
    %c0_i32_0 = arith.constant 0 : i32
    %c0_i32_1 = arith.constant 0 : i32
    return %c0_i32, %c0_i32_0 : i32, i32
  }
  func.func @transform_2(%arg0: i32) -> (i32, i32) {
    %c0_i32 = arith.constant 0 : i32
    %c0_i32_0 = arith.constant 0 : i32
    %c0_i32_1 = arith.constant 0 : i32
    return %c0_i32, %c0_i32_0 : i32, i32
  }
  func.func @transform_3(%arg0: i32) -> (i32, i32) {
    %c0_i32 = arith.constant 0 : i32
    %c0_i32_0 = arith.constant 0 : i32
    %c0_i32_1 = arith.constant 0 : i32
    return %c0_i32, %c0_i32_0 : i32, i32
  }
  func.func @transform_4(%arg0: i32) -> (i32, i32) {
    %c0_i32 = arith.constant 0 : i32
    %c0_i32_0 = arith.constant 0 : i32
    %c0_i32_1 = arith.constant 0 : i32
    return %c0_i32, %c0_i32_0 : i32, i32
  }
  func.func @transform_5(%arg0: i32) -> (i32, i32) {
    %c0_i32 = arith.constant 0 : i32
    %c0_i32_0 = arith.constant 0 : i32
    %c0_i32_1 = arith.constant 0 : i32
    return %c0_i32, %c0_i32_0 : i32, i32
  }
  func.func @transform_6(%arg0: i32) -> (i32, i32) {
    %c0_i32 = arith.constant 0 : i32
    %c0_i32_0 = arith.constant 0 : i32
    %c0_i32_1 = arith.constant 0 : i32
    return %c0_i32, %c0_i32_0 : i32, i32
  }
  func.func @transform_7(%arg0: i32) -> (i32, i32) {
    %c0_i32 = arith.constant 0 : i32
    %c0_i32_0 = arith.constant 0 : i32
    %c0_i32_1 = arith.constant 0 : i32
    return %c0_i32, %c0_i32_0 : i32, i32
  }
  func.func @transform_8(%arg0: i32) -> (i32, i32) {
    %c0_i32 = arith.constant 0 : i32
    %c0_i32_0 = arith.constant 0 : i32
    %c0_i32_1 = arith.constant 0 : i32
    return %c0_i32, %c0_i32_0 : i32, i32
  }
  func.func @transform_9(%arg0: i32) -> (i32, i32) {
    %c0_i32 = arith.constant 0 : i32
    %c0_i32_0 = arith.constant 0 : i32
    %c0_i32_1 = arith.constant 0 : i32
    return %c0_i32, %c0_i32_0 : i32, i32
  }
}

</mosaic_0001>

<llo_original>
// kernel: lstm_forward.1
$region0: #{lstm_forward.1}
  #allocation0 [shape = 'u32[]', space=smem, size = 0x4, offset = 0x4, fixed_abs, tag = 'smem constant byte address 0x4 - core index']
  #allocation1 [shape = 'u32[144,128]{1,0:T(1,128)}', space=vmem, size = 0x12000, scoped, tag = 'internal scratch']
  #allocation2 [shape = 'f32[16,32]{1,0:T(8,128)}', space=vmem, size = 0x2000, scoped, tag = 'scratch operand']
  #allocation3 [shape = 'f32[16,128]{1,0:T(8,128)}', space=vmem, size = 0x2000, scoped, tag = 'scratch operand']
  %s0 = inlined_call_operand.vmem [shape: f32[16,8], index: 0, kind: input, shape index: {}]
  %s1 = inlined_call_operand.hbm [shape: f32[8,128], index: 1, kind: input, shape index: {}]
  %s2 = inlined_call_operand.vmem [shape: f32[32,128], index: 2, kind: input, shape index: {}]
  %s3 = inlined_call_operand.vmem [shape: f32[1,128], index: 3, kind: input, shape index: {}]
  %s4 = inlined_call_operand.vmem [shape: f32[32,128], index: 4, kind: input, shape index: {}]
  %s5 = inlined_call_operand.vmem [shape: f32[32,128], index: 5, kind: input, shape index: {}]
  %s6 = inlined_call_operand.vmem [shape: f32[1,128], index: 6, kind: input, shape index: {}]
  %s7 = inlined_call_operand.vmem [shape: f32[32,4], index: 7, kind: input, shape index: {}]
  %s8 = inlined_call_operand.hbm [shape: f32[1,4], index: 8, kind: input, shape index: {}]
  %s9 = inlined_call_operand.hbm [shape: f32[2,4], index: 9, kind: output, shape index: {}]
  %s10 = sld [smem:[#allocation0]]
  $region54: #{lstm_forward.1} parent=0
    _
  %s12 = ssub.s32 1, %s10
  %s13 = scalar_select 0, %s12, %s10
  $region1: #{lstm_forward.1} parent=0
    #allocation4 [shape = 'u8[4096]{0}', space=vmem, size = 0x1000, scoped, tag = 'input window, operand 1, single buffered']
    #allocation5 [shape = 's32[1]{0}', space=sflag, size = 0x4, scoped, tag = 'scoped memory for lstm_forward.1']
    #allocation6 [shape = 's32[1]{0}', space=sflag, size = 0x4, scoped, tag = 'scoped memory for lstm_forward.1']
    #allocation7 [shape = 'u8[512]{0}', space=vmem, size = 0x400, scoped, tag = 'input window, operand 8, single buffered']
    #allocation8 [shape = 's32[1]{0}', space=sflag, size = 0x4, scoped, tag = 'scoped memory for lstm_forward.1']
    #allocation9 [shape = 'u8[1024]{0}', space=vmem, size = 0x400, scoped, tag = 'output window, operand 0, single buffered']
    %14 = vsyncpa [#allocation5], 0
    %15 = vsyncpa [#allocation8], 0
    %16 = vsyncpa [#allocation6], 0
    // Predicated region
    $region2: #{lstm_forward.1} parent=1 // pred_check
      _
    $region3: #{lstm_forward.1} parent=1 // pred_check_branch
      %18 = sbr.rel (0) target = $region5
    $region4: #{lstm_forward.1} parent=1 // pred_region
      _
    $region5: #{lstm_forward.1} parent=1 // pred_fallthru
      _
    // Predicated region
    $region6: #{lstm_forward.1} parent=1 // pred_check
      _
    $region7: #{lstm_forward.1} parent=1 // pred_check_branch
      %20 = sbr.rel (0) target = $region9
    $region8: #{lstm_forward.1} parent=1 // pred_region
      %s22 = ssub.s32 128, 128
      %23 = vsyncadd [#allocation5], %s22
      %s25 = sshll.u32 [#allocation4], 4
      %s26 = int_to_ptr.vmem [resolvable:$true] %s25
      %28 = dma.hbm_to_vmem [thread:$0]  %s1, 128, %s26, [#allocation5]
    $region9: #{lstm_forward.1} parent=1 // pred_fallthru
      _
    // Predicated region
    $region10: #{lstm_forward.1} parent=1 // pred_check
      _
    $region11: #{lstm_forward.1} parent=1 // pred_check_branch
      %30 = sbr.rel (0) target = $region13
    $region12: #{lstm_forward.1} parent=1 // pred_region
      _
    $region13: #{lstm_forward.1} parent=1 // pred_fallthru
      _
    // Predicated region
    $region14: #{lstm_forward.1} parent=1 // pred_check
      _
    $region15: #{lstm_forward.1} parent=1 // pred_check_branch
      %32 = sbr.rel (0) target = $region17
    $region16: #{lstm_forward.1} parent=1 // pred_region
      _
    $region17: #{lstm_forward.1} parent=1 // pred_fallthru
      _
    // Predicated region
    $region18: #{lstm_forward.1} parent=1 // pred_check
      _
    $region19: #{lstm_forward.1} parent=1 // pred_check_branch
      %34 = sbr.rel (0) target = $region21
    $region20: #{lstm_forward.1} parent=1 // pred_region
      _
    $region21: #{lstm_forward.1} parent=1 // pred_fallthru
      _
    // Predicated region
    $region22: #{lstm_forward.1} parent=1 // pred_check
      _
    $region23: #{lstm_forward.1} parent=1 // pred_check_branch
      %36 = sbr.rel (0) target = $region25
    $region24: #{lstm_forward.1} parent=1 // pred_region
      _
    $region25: #{lstm_forward.1} parent=1 // pred_fallthru
      _
    // Predicated region
    $region26: #{lstm_forward.1} parent=1 // pred_check
      _
    $region27: #{lstm_forward.1} parent=1 // pred_check_branch
      %38 = sbr.rel (0) target = $region29
    $region28: #{lstm_forward.1} parent=1 // pred_region
      _
    $region29: #{lstm_forward.1} parent=1 // pred_fallthru
      _
    // Predicated region
    $region30: #{lstm_forward.1} parent=1 // pred_check
      _
    $region31: #{lstm_forward.1} parent=1 // pred_check_branch
      %40 = sbr.rel (0) target = $region33
    $region32: #{lstm_forward.1} parent=1 // pred_region
      _
    $region33: #{lstm_forward.1} parent=1 // pred_fallthru
      _
    // Predicated region
    $region34: #{lstm_forward.1} parent=1 // pred_check
      _
    $region35: #{lstm_forward.1} parent=1 // pred_check_branch
      %42 = sbr.rel (0) target = $region37
    $region36: #{lstm_forward.1} parent=1 // pred_region
      %s44 = ssub.s32 16, 16
      %45 = vsyncadd [#allocation8], %s44
      %s47 = sshll.u32 [#allocation7], 4
      %s48 = int_to_ptr.vmem [resolvable:$true] %s47
      %50 = dma.hbm_to_vmem [thread:$0]  %s8, 16, %s48, [#allocation8]
    $region37: #{lstm_forward.1} parent=1 // pred_fallthru
      _
    // Predicated region
    $region38: #{lstm_forward.1} parent=1 // pred_check
      _
    $region39: #{lstm_forward.1} parent=1 // pred_check_branch
      %52 = sbr.rel (0) target = $region41
    $region40: #{lstm_forward.1} parent=1 // pred_region
      %53 = dma.done [#allocation5], 128
    $region41: #{lstm_forward.1} parent=1 // pred_fallthru
      _
    // Predicated region
    $region42: #{lstm_forward.1} parent=1 // pred_check
      _
    $region43: #{lstm_forward.1} parent=1 // pred_check_branch
      %55 = sbr.rel (0) target = $region45
    $region44: #{lstm_forward.1} parent=1 // pred_region
      %56 = dma.done [#allocation8], 16
    $region45: #{lstm_forward.1} parent=1 // pred_fallthru
      _
    %v57 = vld [vmem:[%s0] sm:$0xff]
    %v58 = vld [vmem:[%s0 + $0x8] sm:$0xff]
    %v59 = vld [vmem:[#allocation4] sm:$0xff]
    %v60 = vld [vmem:[%s3] sm:$0x1]
    %v62 = vlaneseq
    %v63 = vshrl.u32 %v62, 7
    %v64 = vsub.s32 0, %v63
    %v65 = vrot.slane %v60, %v64
    %vm67 = vcmask 64512
    %v69 = vsel %vm67, %v57, 0
    %v72 = vsel %vm67, %v58, 0
    %74 = vmatprep.subr.mxu0 0.0
    %75 = vmatpush1.msra.mxu0 %v59
    %76 = vmatprep.subr.mxu0 0.0
    %77 = vmatpush1.msra.mxu0 0.0
    %78 = vmatprep.subr.mxu0 0.0
    %79 = vmatpush1.msra.mxu0 0.0
    %80 = vmatprep.subr.mxu0 0.0
    %81 = vmatpush1.msra.mxu0 0.0
    %82 = vmatprep.subr.mxu0 0.0
    %83 = vmatpush1.msra.mxu0 0.0
    %84 = vmatprep.subr.mxu0 0.0
    %85 = vmatpush1.msra.mxu0 0.0
    %86 = vmatprep.subr.mxu0 0.0
    %87 = vmatpush1.msra.mxu0 0.0
    %88 = vmatprep.subr.mxu0 0.0
    %89 = vmatpush1.msra.mxu0 0.0
    %90 = vmatprep.subr.mxu0 0.0
    %91 = vmatpush1.msra.mxu0 0.0
    %92 = vmatprep.subr.mxu0 0.0
    %93 = vmatpush1.msra.mxu0 0.0
    %94 = vmatprep.subr.mxu0 0.0
    %95 = vmatpush1.msra.mxu0 0.0
    %96 = vmatprep.subr.mxu0 0.0
    %97 = vmatpush1.msra.mxu0 0.0
    %98 = vmatprep.subr.mxu0 0.0
    %99 = vmatpush1.msra.mxu0 0.0
    %100 = vmatprep.subr.mxu0 0.0
    %101 = vmatpush1.msra.mxu0 0.0
    %102 = vmatprep.subr.mxu0 0.0
    %103 = vmatpush1.msra.mxu0 0.0
    %104 = vmatprep.subr.mxu0 0.0
    %105 = vmatpush1.msra.mxu0 0.0
    %106 = vmatprep.subr.mxu0 0.0
    %107 = vmatpush1.msra.mxu0 0.0
    %108 = vmatprep.subr.mxu0 0.0
    %109 = vmatpush1.msra.mxu0 0.0
    %110 = vmatprep.subr.mxu0 0.0
    %111 = vmatpush1.msra.mxu0 0.0
    %112 = vmatprep.subr.mxu0 0.0
    %113 = vmatpush1.msra.mxu0 0.0
    %114 = vmatprep.subr.mxu0 0.0
    %115 = vmatpush1.msra.mxu0 0.0
    %116 = vmatprep.subr.mxu0 0.0
    %117 = vmatpush1.msra.mxu0 0.0
    %118 = vmatprep.subr.mxu0 0.0
    %119 = vmatpush1.msra.mxu0 0.0
    %120 = vmatprep.subr.mxu0 0.0
    %121 = vmatpush1.msra.mxu0 0.0
    %122 = vmatprep.subr.mxu0 0.0
    %123 = vmatpush1.msra.mxu0 0.0
    %124 = vmatprep.subr.mxu0 0.0
    %125 = vmatpush1.msra.mxu0 0.0
    %126 = vmatprep.subr.mxu0 0.0
    %127 = vmatpush1.msra.mxu0 0.0
    %128 = vmatprep.subr.mxu0 0.0
    %129 = vmatpush1.msra.mxu0 0.0
    %130 = vmatprep.subr.mxu0 0.0
    %131 = vmatpush1.msra.mxu0 0.0
    %132 = vmatprep.subr.mxu0 0.0
    %133 = vmatpush1.msra.mxu0 0.0
    %134 = vmatprep.subr.mxu0 0.0
    %135 = vmatpush1.msra.mxu0 0.0
    %136 = vmatprep.subr.mxu0 0.0
    %137 = vmatpush1.msra.mxu0 0.0
    %138 = vmatprep.mubr.f32.mxu0 0.0
    %139 = vmatmul.mubr.f32.gmra.mrb[0].mxu0 %v69
    %v140 = vpop.f32.mrb[0].mxu0
    %v141 = vadd.f32 %v65, %v140
    %v142 = vpop.f32.mrb[0].mxu0
    %143 = vmatprep.mubr.f32.mxu0 0.0
    %144 = vmatmul.mubr.f32.gmra.mrb[0].mxu0 %v72
    %v145 = vpop.f32.mrb[0].mxu0
    %v146 = vadd.f32 %v65, %v145
    %v147 = vpop.f32.mrb[0].mxu0
    %148 = vdwg.mxu0
    %149 = vst [vmem:[#allocation3] sm:$0xff] %v141
    %150 = vst [vmem:[#allocation3 + $0x8] sm:$0xff] %v146
    %v151 = vld [vmem:[%s2] sm:$0xff]
    %v152 = vld [vmem:[%s2 + $0x8] sm:$0xff]
    %v153 = vld [vmem:[%s2 + $0x10] sm:$0xff]
    %v154 = vld [vmem:[%s2 + $0x18] sm:$0xff]
    %v155 = vld [vmem:[#allocation3] sm:$0x3]
    %vm156 = vcmask 261120
    %v158 = vsel %vm156, 0.0, 0
    %160 = vmatprep.subr.mxu0 0.0
    %161 = vmatpush1.msra.mxu0 %v151
    %162 = vmatprep.subr.mxu0 0.0
    %163 = vmatpush1.msra.mxu0 %v152
    %164 = vmatprep.subr.mxu0 0.0
    %165 = vmatpush1.msra.mxu0 %v153
    %166 = vmatprep.subr.mxu0 0.0
    %167 = vmatpush1.msra.mxu0 %v154
    %168 = vmatprep.subr.mxu0 0.0
    %169 = vmatpush1.msra.mxu0 0.0
    %170 = vmatprep.subr.mxu0 0.0
    %171 = vmatpush1.msra.mxu0 0.0
    %172 = vmatprep.subr.mxu0 0.0
    %173 = vmatpush1.msra.mxu0 0.0
    %174 = vmatprep.subr.mxu0 0.0
    %175 = vmatpush1.msra.mxu0 0.0
    %176 = vmatprep.subr.mxu0 0.0
    %177 = vmatpush1.msra.mxu0 0.0
    %178 = vmatprep.subr.mxu0 0.0
    %179 = vmatpush1.msra.mxu0 0.0
    %180 = vmatprep.subr.mxu0 0.0
    %181 = vmatpush1.msra.mxu0 0.0
    %182 = vmatprep.subr.mxu0 0.0
    %183 = vmatpush1.msra.mxu0 0.0
    %184 = vmatprep.subr.mxu0 0.0
    %185 = vmatpush1.msra.mxu0 0.0
    %186 = vmatprep.subr.mxu0 0.0
    %187 = vmatpush1.msra.mxu0 0.0
    %188 = vmatprep.subr.mxu0 0.0
    %189 = vmatpush1.msra.mxu0 0.0
    %190 = vmatprep.subr.mxu0 0.0
    %191 = vmatpush1.msra.mxu0 0.0
    %192 = vmatprep.subr.mxu0 0.0
    %193 = vmatpush1.msra.mxu0 0.0
    %194 = vmatprep.subr.mxu0 0.0
    %195 = vmatpush1.msra.mxu0 0.0
    %196 = vmatprep.subr.mxu0 0.0
    %197 = vmatpush1.msra.mxu0 0.0
    %198 = vmatprep.subr.mxu0 0.0
    %199 = vmatpush1.msra.mxu0 0.0
    %200 = vmatprep.subr.mxu0 0.0
    %201 = vmatpush1.msra.mxu0 0.0
    %202 = vmatprep.subr.mxu0 0.0
    %203 = vmatpush1.msra.mxu0 0.0
    %204 = vmatprep.subr.mxu0 0.0
    %205 = vmatpush1.msra.mxu0 0.0
    %206 = vmatprep.subr.mxu0 0.0
    %207 = vmatpush1.msra.mxu0 0.0
    %208 = vmatprep.subr.mxu0 0.0
    %209 = vmatpush1.msra.mxu0 0.0
    %210 = vmatprep.subr.mxu0 0.0
    %211 = vmatpush1.msra.mxu0 0.0
    %212 = vmatprep.subr.mxu0 0.0
    %213 = vmatpush1.msra.mxu0 0.0
    %214 = vmatprep.subr.mxu0 0.0
    %215 = vmatpush1.msra.mxu0 0.0
    %216 = vmatprep.subr.mxu0 0.0
    %217 = vmatpush1.msra.mxu0 0.0
    %218 = vmatprep.subr.mxu0 0.0
    %219 = vmatpush1.msra.mxu0 0.0
    %220 = vmatprep.subr.mxu0 0.0
    %221 = vmatpush1.msra.mxu0 0.0
    %222 = vmatprep.subr.mxu0 0.0
    %223 = vmatpush1.msra.mxu0 0.0
    %224 = vmatprep.mubr.f32.mxu0 0.0
    %225 = vmatmul.mubr.f32.gmra.mrb[0].mxu0 %v158
    %v226 = vpop.f32.mrb[0].mxu0
    %v227 = vadd.f32 0.0, %v226
    %v228 = vpop.f32.mrb[0].mxu0
    %229 = vdwg.mxu0
    %v230 = vadd.f32 %v155, %v227
    %v231 = vxor.u32 %v230, 2147483648
    %v232 = vmul.f32 %v231, 1.442695
    %v233 = vpow.pop %v232
    %v234 = vadd.f32 %v233, 1.0
    %v235 = vrcp.pop %v234
    %v236 = vmul.f32 1.0, %v235
    %v237 = vtanh.pop %v230
    %v238 = vmul.f32 %v236, 0.0
    %240 = vrot.lane.b32.xlu0 %v237, 64
    %v241 = vpop.permute.xlu0 %240
    %v243 = vmul.f32 %v236, %v241
    %245 = vrot.lane.b32.xlu0 %v243, 32
    %v246 = vpop.permute.xlu0 %245
    %v248 = vadd.f32 %v238, %v246
    %v249 = vtanh.pop %v248
    %251 = vrot.lane.b32.xlu0 %v249, 64
    %v252 = vpop.permute.xlu0 %251
    %v254 = vmul.f32 %v236, %v252
    %256 = vrot.lane.b32.xlu0 %v254, 32
    %v257 = vpop.permute.xlu0 %256
    %vm259 = vcmask 254976
    %260 = vst.msk [vmem:[#allocation2] sm:$0x3] %vm259, %v257
    %s261 = scalar_lea.vmem [#allocation3], 2
    %v262 = vld [vmem:[%s261] sm:$0x3]
    %v263 = vsel %vm156, %v257, 0
    %265 = vmatprep.subr.mxu0 0.0
    %266 = vmatpush1.msra.mxu0 %v151
    %267 = vmatprep.subr.mxu0 0.0
    %268 = vmatpush1.msra.mxu0 %v152
    %269 = vmatprep.subr.mxu0 0.0
    %270 = vmatpush1.msra.mxu0 %v153
    %271 = vmatprep.subr.mxu0 0.0
    %272 = vmatpush1.msra.mxu0 %v154
    %273 = vmatprep.subr.mxu0 0.0
    %274 = vmatpush1.msra.mxu0 0.0
    %275 = vmatprep.subr.mxu0 0.0
    %276 = vmatpush1.msra.mxu0 0.0
    %277 = vmatprep.subr.mxu0 0.0
    %278 = vmatpush1.msra.mxu0 0.0
    %279 = vmatprep.subr.mxu0 0.0
    %280 = vmatpush1.msra.mxu0 0.0
    %281 = vmatprep.subr.mxu0 0.0
    %282 = vmatpush1.msra.mxu0 0.0
    %283 = vmatprep.subr.mxu0 0.0
    %284 = vmatpush1.msra.mxu0 0.0
    %285 = vmatprep.subr.mxu0 0.0
    %286 = vmatpush1.msra.mxu0 0.0
    %287 = vmatprep.subr.mxu0 0.0
    %288 = vmatpush1.msra.mxu0 0.0
    %289 = vmatprep.subr.mxu0 0.0
    %290 = vmatpush1.msra.mxu0 0.0
    %291 = vmatprep.subr.mxu0 0.0
    %292 = vmatpush1.msra.mxu0 0.0
    %293 = vmatprep.subr.mxu0 0.0
    %294 = vmatpush1.msra.mxu0 0.0
    %295 = vmatprep.subr.mxu0 0.0
    %296 = vmatpush1.msra.mxu0 0.0
    %297 = vmatprep.subr.mxu0 0.0
    %298 = vmatpush1.msra.mxu0 0.0
    %299 = vmatprep.subr.mxu0 0.0
    %300 = vmatpush1.msra.mxu0 0.0
    %301 = vmatprep.subr.mxu0 0.0
    %302 = vmatpush1.msra.mxu0 0.0
    %303 = vmatprep.subr.mxu0 0.0
    %304 = vmatpush1.msra.mxu0 0.0
    %305 = vmatprep.subr.mxu0 0.0
    %306 = vmatpush1.msra.mxu0 0.0
    %307 = vmatprep.subr.mxu0 0.0
    %308 = vmatpush1.msra.mxu0 0.0
    %309 = vmatprep.subr.mxu0 0.0
    %310 = vmatpush1.msra.mxu0 0.0
    %311 = vmatprep.subr.mxu0 0.0
    %312 = vmatpush1.msra.mxu0 0.0
    %313 = vmatprep.subr.mxu0 0.0
    %314 = vmatpush1.msra.mxu0 0.0
    %315 = vmatprep.subr.mxu0 0.0
    %316 = vmatpush1.msra.mxu0 0.0
    %317 = vmatprep.subr.mxu0 0.0
    %318 = vmatpush1.msra.mxu0 0.0
    %319 = vmatprep.subr.mxu0 0.0
    %320 = vmatpush1.msra.mxu0 0.0
    %321 = vmatprep.subr.mxu0 0.0
    %322 = vmatpush1.msra.mxu0 0.0
    %323 = vmatprep.subr.mxu0 0.0
    %324 = vmatpush1.msra.mxu0 0.0
    %325 = vmatprep.subr.mxu0 0.0
    %326 = vmatpush1.msra.mxu0 0.0
    %327 = vmatprep.subr.mxu0 0.0
    %328 = vmatpush1.msra.mxu0 0.0
    %329 = vmatprep.mubr.f32.mxu0 0.0
    %330 = vmatmul.mubr.f32.gmra.mrb[0].mxu0 %v263
    %v331 = vpop.f32.mrb[0].mxu0
    %v332 = vadd.f32 0.0, %v331
    %v333 = vpop.f32.mrb[0].mxu0
    %334 = vdwg.mxu0
    %v335 = vadd.f32 %v262, %v332
    %v336 = vxor.u32 %v335, 2147483648
    %v337 = vmul.f32 %v336, 1.442695
    %v338 = vpow.pop %v337
    %v339 = vadd.f32 %v338, 1.0
    %v340 = vrcp.pop %v339
    %v341 = vmul.f32 1.0, %v340
    %v342 = vtanh.pop %v335
    %v343 = vmul.f32 %v341, %v248
    %345 = vrot.lane.b32.xlu0 %v342, 64
    %v346 = vpop.permute.xlu0 %345
    %v348 = vmul.f32 %v341, %v346
    %350 = vrot.lane.b32.xlu0 %v348, 32
    %v351 = vpop.permute.xlu0 %350
    %v353 = vadd.f32 %v343, %v351
    %v354 = vtanh.pop %v353
    %356 = vrot.lane.b32.xlu0 %v354, 64
    %v357 = vpop.permute.xlu0 %356
    %v359 = vmul.f32 %v341, %v357
    %361 = vrot.lane.b32.xlu0 %v359, 32
    %v362 = vpop.permute.xlu0 %361
    %s364 = scalar_lea.vmem [#allocation2], 2
    %365 = vst.msk [vmem:[%s364] sm:$0x3] %vm259, %v362
    %s366 = scalar_lea.vmem [#allocation3], 4
    %v367 = vld [vmem:[%s366] sm:$0x3]
    %v368 = vsel %vm156, %v362, 0
    %370 = vmatprep.subr.mxu0 0.0
    %371 = vmatpush1.msra.mxu0 %v151
    %372 = vmatprep.subr.mxu0 0.0
    %373 = vmatpush1.msra.mxu0 %v152
    %374 = vmatprep.subr.mxu0 0.0
    %375 = vmatpush1.msra.mxu0 %v153
    %376 = vmatprep.subr.mxu0 0.0
    %377 = vmatpush1.msra.mxu0 %v154
    %378 = vmatprep.subr.mxu0 0.0
    %379 = vmatpush1.msra.mxu0 0.0
    %380 = vmatprep.subr.mxu0 0.0
    %381 = vmatpush1.msra.mxu0 0.0
    %382 = vmatprep.subr.mxu0 0.0
    %383 = vmatpush1.msra.mxu0 0.0
    %384 = vmatprep.subr.mxu0 0.0
    %385 = vmatpush1.msra.mxu0 0.0
    %386 = vmatprep.subr.mxu0 0.0
    %387 = vmatpush1.msra.mxu0 0.0
    %388 = vmatprep.subr.mxu0 0.0
    %389 = vmatpush1.msra.mxu0 0.0
    %390 = vmatprep.subr.mxu0 0.0
    %391 = vmatpush1.msra.mxu0 0.0
    %392 = vmatprep.subr.mxu0 0.0
    %393 = vmatpush1.msra.mxu0 0.0
    %394 = vmatprep.subr.mxu0 0.0
    %395 = vmatpush1.msra.mxu0 0.0
    %396 = vmatprep.subr.mxu0 0.0
    %397 = vmatpush1.msra.mxu0 0.0
    %398 = vmatprep.subr.mxu0 0.0
    %399 = vmatpush1.msra.mxu0 0.0
    %400 = vmatprep.subr.mxu0 0.0
    %401 = vmatpush1.msra.mxu0 0.0
    %402 = vmatprep.subr.mxu0 0.0
    %403 = vmatpush1.msra.mxu0 0.0
    %404 = vmatprep.subr.mxu0 0.0
    %405 = vmatpush1.msra.mxu0 0.0
    %406 = vmatprep.subr.mxu0 0.0
    %407 = vmatpush1.msra.mxu0 0.0
    %408 = vmatprep.subr.mxu0 0.0
    %409 = vmatpush1.msra.mxu0 0.0
    %410 = vmatprep.subr.mxu0 0.0
    %411 = vmatpush1.msra.mxu0 0.0
    %412 = vmatprep.subr.mxu0 0.0
    %413 = vmatpush1.msra.mxu0 0.0
    %414 = vmatprep.subr.mxu0 0.0
    %415 = vmatpush1.msra.mxu0 0.0
    %416 = vmatprep.subr.mxu0 0.0
    %417 = vmatpush1.msra.mxu0 0.0
    %418 = vmatprep.subr.mxu0 0.0
    %419 = vmatpush1.msra.mxu0 0.0
    %420 = vmatprep.subr.mxu0 0.0
    %421 = vmatpush1.msra.mxu0 0.0
    %422 = vmatprep.subr.mxu0 0.0
    %423 = vmatpush1.msra.mxu0 0.0
    %424 = vmatprep.subr.mxu0 0.0
    %425 = vmatpush1.msra.mxu0 0.0
    %426 = vmatprep.subr.mxu0 0.0
    %427 = vmatpush1.msra.mxu0 0.0
    %428 = vmatprep.subr.mxu0 0.0
    %429 = vmatpush1.msra.mxu0 0.0
    %430 = vmatprep.subr.mxu0 0.0
    %431 = vmatpush1.msra.mxu0 0.0
    %432 = vmatprep.subr.mxu0 0.0
    %433 = vmatpush1.msra.mxu0 0.0
    %434 = vmatprep.mubr.f32.mxu0 0.0
    %435 = vmatmul.mubr.f32.gmra.mrb[0].mxu0 %v368
    %v436 = vpop.f32.mrb[0].mxu0
    %v437 = vadd.f32 0.0, %v436
    %v438 = vpop.f32.mrb[0].mxu0
    %439 = vdwg.mxu0
    %v440 = vadd.f32 %v367, %v437
    %v441 = vxor.u32 %v440, 2147483648
    %v442 = vmul.f32 %v441, 1.442695
    %v443 = vpow.pop %v442
    %v444 = vadd.f32 %v443, 1.0
    %v445 = vrcp.pop %v444
    %v446 = vmul.f32 1.0, %v445
    %v447 = vtanh.pop %v440
    %v448 = vmul.f32 %v446, %v353
    %450 = vrot.lane.b32.xlu0 %v447, 64
    %v451 = vpop.permute.xlu0 %450
    %v453 = vmul.f32 %v446, %v451
    %455 = vrot.lane.b32.xlu0 %v453, 32
    %v456 = vpop.permute.xlu0 %455
    %v458 = vadd.f32 %v448, %v456
    %v459 = vtanh.pop %v458
    %461 = vrot.lane.b32.xlu0 %v459, 64
    %v462 = vpop.permute.xlu0 %461
    %v464 = vmul.f32 %v446, %v462
    %466 = vrot.lane.b32.xlu0 %v464, 32
    %v467 = vpop.permute.xlu0 %466
    %s469 = scalar_lea.vmem [#allocation2], 4
    %470 = vst.msk [vmem:[%s469] sm:$0x3] %vm259, %v467
    %s471 = scalar_lea.vmem [#allocation3], 6
    %v472 = vld [vmem:[%s471] sm:$0x3]
    %v473 = vsel %vm156, %v467, 0
    %475 = vmatprep.subr.mxu0 0.0
    %476 = vmatpush1.msra.mxu0 %v151
    %477 = vmatprep.subr.mxu0 0.0
    %478 = vmatpush1.msra.mxu0 %v152
    %479 = vmatprep.subr.mxu0 0.0
    %480 = vmatpush1.msra.mxu0 %v153
    %481 = vmatprep.subr.mxu0 0.0
    %482 = vmatpush1.msra.mxu0 %v154
    %483 = vmatprep.subr.mxu0 0.0
    %484 = vmatpush1.msra.mxu0 0.0
    %485 = vmatprep.subr.mxu0 0.0
    %486 = vmatpush1.msra.mxu0 0.0
    %487 = vmatprep.subr.mxu0 0.0
    %488 = vmatpush1.msra.mxu0 0.0
    %489 = vmatprep.subr.mxu0 0.0
    %490 = vmatpush1.msra.mxu0 0.0
    %491 = vmatprep.subr.mxu0 0.0
    %492 = vmatpush1.msra.mxu0 0.0
    %493 = vmatprep.subr.mxu0 0.0
    %494 = vmatpush1.msra.mxu0 0.0
    %495 = vmatprep.subr.mxu0 0.0
    %496 = vmatpush1.msra.mxu0 0.0
    %497 = vmatprep.subr.mxu0 0.0
    %498 = vmatpush1.msra.mxu0 0.0
    %499 = vmatprep.subr.mxu0 0.0
    %500 = vmatpush1.msra.mxu0 0.0
    %501 = vmatprep.subr.mxu0 0.0
    %502 = vmatpush1.msra.mxu0 0.0
    %503 = vmatprep.subr.mxu0 0.0
    %504 = vmatpush1.msra.mxu0 0.0
    %505 = vmatprep.subr.mxu0 0.0
    %506 = vmatpush1.msra.mxu0 0.0
    %507 = vmatprep.subr.mxu0 0.0
    %508 = vmatpush1.msra.mxu0 0.0
    %509 = vmatprep.subr.mxu0 0.0
    %510 = vmatpush1.msra.mxu0 0.0
    %511 = vmatprep.subr.mxu0 0.0
    %512 = vmatpush1.msra.mxu0 0.0
    %513 = vmatprep.subr.mxu0 0.0
    %514 = vmatpush1.msra.mxu0 0.0
    %515 = vmatprep.subr.mxu0 0.0
    %516 = vmatpush1.msra.mxu0 0.0
    %517 = vmatprep.subr.mxu0 0.0
    %518 = vmatpush1.msra.mxu0 0.0
    %519 = vmatprep.subr.mxu0 0.0
    %520 = vmatpush1.msra.mxu0 0.0
    %521 = vmatprep.subr.mxu0 0.0
    %522 = vmatpush1.msra.mxu0 0.0
    %523 = vmatprep.subr.mxu0 0.0
    %524 = vmatpush1.msra.mxu0 0.0
    %525 = vmatprep.subr.mxu0 0.0
    %526 = vmatpush1.msra.mxu0 0.0
    %527 = vmatprep.subr.mxu0 0.0
    %528 = vmatpush1.msra.mxu0 0.0
    %529 = vmatprep.subr.mxu0 0.0
    %530 = vmatpush1.msra.mxu0 0.0
    %531 = vmatprep.subr.mxu0 0.0
    %532 = vmatpush1.msra.mxu0 0.0
    %533 = vmatprep.subr.mxu0 0.0
    %534 = vmatpush1.msra.mxu0 0.0
    %535 = vmatprep.subr.mxu0 0.0
    %536 = vmatpush1.msra.mxu0 0.0
    %537 = vmatprep.subr.mxu0 0.0
    %538 = vmatpush1.msra.mxu0 0.0
    %539 = vmatprep.mubr.f32.mxu0 0.0
    %540 = vmatmul.mubr.f32.gmra.mrb[0].mxu0 %v473
    %v541 = vpop.f32.mrb[0].mxu0
    %v542 = vadd.f32 0.0, %v541
    %v543 = vpop.f32.mrb[0].mxu0
    %544 = vdwg.mxu0
    %v545 = vadd.f32 %v472, %v542
    %v546 = vxor.u32 %v545, 2147483648
    %v547 = vmul.f32 %v546, 1.442695
    %v548 = vpow.pop %v547
    %v549 = vadd.f32 %v548, 1.0
    %v550 = vrcp.pop %v549
    %v551 = vmul.f32 1.0, %v550
    %v552 = vtanh.pop %v545
    %v553 = vmul.f32 %v551, %v458
    %555 = vrot.lane.b32.xlu0 %v552, 64
    %v556 = vpop.permute.xlu0 %555
    %v558 = vmul.f32 %v551, %v556
    %560 = vrot.lane.b32.xlu0 %v558, 32
    %v561 = vpop.permute.xlu0 %560
    %v563 = vadd.f32 %v553, %v561
    %v564 = vtanh.pop %v563
    %566 = vrot.lane.b32.xlu0 %v564, 64
    %v567 = vpop.permute.xlu0 %566
    %v569 = vmul.f32 %v551, %v567
    %571 = vrot.lane.b32.xlu0 %v569, 32
    %v572 = vpop.permute.xlu0 %571
    %s574 = scalar_lea.vmem [#allocation2], 6
    %575 = vst.msk [vmem:[%s574] sm:$0x3] %vm259, %v572
    %s576 = scalar_lea.vmem [#allocation3], 8
    %v577 = vld [vmem:[%s576] sm:$0x3]
    %v578 = vsel %vm156, %v572, 0
    %580 = vmatprep.subr.mxu0 0.0
    %581 = vmatpush1.msra.mxu0 %v151
    %582 = vmatprep.subr.mxu0 0.0
    %583 = vmatpush1.msra.mxu0 %v152
    %584 = vmatprep.subr.mxu0 0.0
    %585 = vmatpush1.msra.mxu0 %v153
    %586 = vmatprep.subr.mxu0 0.0
    %587 = vmatpush1.msra.mxu0 %v154
    %588 = vmatprep.subr.mxu0 0.0
    %589 = vmatpush1.msra.mxu0 0.0
    %590 = vmatprep.subr.mxu0 0.0
    %591 = vmatpush1.msra.mxu0 0.0
    %592 = vmatprep.subr.mxu0 0.0
    %593 = vmatpush1.msra.mxu0 0.0
    %594 = vmatprep.subr.mxu0 0.0
    %595 = vmatpush1.msra.mxu0 0.0
    %596 = vmatprep.subr.mxu0 0.0
    %597 = vmatpush1.msra.mxu0 0.0
    %598 = vmatprep.subr.mxu0 0.0
    %599 = vmatpush1.msra.mxu0 0.0
    %600 = vmatprep.subr.mxu0 0.0
    %601 = vmatpush1.msra.mxu0 0.0
    %602 = vmatprep.subr.mxu0 0.0
    %603 = vmatpush1.msra.mxu0 0.0
    %604 = vmatprep.subr.mxu0 0.0
    %605 = vmatpush1.msra.mxu0 0.0
    %606 = vmatprep.subr.mxu0 0.0
    %607 = vmatpush1.msra.mxu0 0.0
    %608 = vmatprep.subr.mxu0 0.0
    %609 = vmatpush1.msra.mxu0 0.0
    %610 = vmatprep.subr.mxu0 0.0
    %611 = vmatpush1.msra.mxu0 0.0
    %612 = vmatprep.subr.mxu0 0.0
    %613 = vmatpush1.msra.mxu0 0.0
    %614 = vmatprep.subr.mxu0 0.0
    %615 = vmatpush1.msra.mxu0 0.0
    %616 = vmatprep.subr.mxu0 0.0
    %617 = vmatpush1.msra.mxu0 0.0
    %618 = vmatprep.subr.mxu0 0.0
    %619 = vmatpush1.msra.mxu0 0.0
    %620 = vmatprep.subr.mxu0 0.0
    %621 = vmatpush1.msra.mxu0 0.0
    %622 = vmatprep.subr.mxu0 0.0
    %623 = vmatpush1.msra.mxu0 0.0
    %624 = vmatprep.subr.mxu0 0.0
    %625 = vmatpush1.msra.mxu0 0.0
    %626 = vmatprep.subr.mxu0 0.0
    %627 = vmatpush1.msra.mxu0 0.0
    %628 = vmatprep.subr.mxu0 0.0
    %629 = vmatpush1.msra.mxu0 0.0
    %630 = vmatprep.subr.mxu0 0.0
    %631 = vmatpush1.msra.mxu0 0.0
    %632 = vmatprep.subr.mxu0 0.0
    %633 = vmatpush1.msra.mxu0 0.0
    %634 = vmatprep.subr.mxu0 0.0
    %635 = vmatpush1.msra.mxu0 0.0
    %636 = vmatprep.subr.mxu0 0.0
    %637 = vmatpush1.msra.mxu0 0.0
    %638 = vmatprep.subr.mxu0 0.0
    %639 = vmatpush1.msra.mxu0 0.0
    %640 = vmatprep.subr.mxu0 0.0
    %641 = vmatpush1.msra.mxu0 0.0
    %642 = vmatprep.subr.mxu0 0.0
    %643 = vmatpush1.msra.mxu0 0.0
    %644 = vmatprep.mubr.f32.mxu0 0.0
    %645 = vmatmul.mubr.f32.gmra.mrb[0].mxu0 %v578
    %v646 = vpop.f32.mrb[0].mxu0
    %v647 = vadd.f32 0.0, %v646
    %v648 = vpop.f32.mrb[0].mxu0
    %649 = vdwg.mxu0
    %v650 = vadd.f32 %v577, %v647
    %v651 = vxor.u32 %v650, 2147483648
    %v652 = vmul.f32 %v651, 1.442695
    %v653 = vpow.pop %v652
    %v654 = vadd.f32 %v653, 1.0
    %v655 = vrcp.pop %v654
    %v656 = vmul.f32 1.0, %v655
    %v657 = vtanh.pop %v650
    %v658 = vmul.f32 %v656, %v563
    %660 = vrot.lane.b32.xlu0 %v657, 64
    %v661 = vpop.permute.xlu0 %660
    %v663 = vmul.f32 %v656, %v661
    %665 = vrot.lane.b32.xlu0 %v663, 32
    %v666 = vpop.permute.xlu0 %665
    %v668 = vadd.f32 %v658, %v666
    %v669 = vtanh.pop %v668
    %671 = vrot.lane.b32.xlu0 %v669, 64
    %v672 = vpop.permute.xlu0 %671
    %v674 = vmul.f32 %v656, %v672
    %676 = vrot.lane.b32.xlu0 %v674, 32
    %v677 = vpop.permute.xlu0 %676
    %s679 = scalar_lea.vmem [#allocation2], 8
    %680 = vst.msk [vmem:[%s679] sm:$0x3] %vm259, %v677
    %s681 = scalar_lea.vmem [#allocation3], 10
    %v682 = vld [vmem:[%s681] sm:$0x3]
    %v683 = vsel %vm156, %v677, 0
    %685 = vmatprep.subr.mxu0 0.0
    %686 = vmatpush1.msra.mxu0 %v151
    %687 = vmatprep.subr.mxu0 0.0
    %688 = vmatpush1.msra.mxu0 %v152
    %689 = vmatprep.subr.mxu0 0.0
    %690 = vmatpush1.msra.mxu0 %v153
    %691 = vmatprep.subr.mxu0 0.0
    %692 = vmatpush1.msra.mxu0 %v154
    %693 = vmatprep.subr.mxu0 0.0
    %694 = vmatpush1.msra.mxu0 0.0
    %695 = vmatprep.subr.mxu0 0.0
    %696 = vmatpush1.msra.mxu0 0.0
    %697 = vmatprep.subr.mxu0 0.0
    %698 = vmatpush1.msra.mxu0 0.0
    %699 = vmatprep.subr.mxu0 0.0
    %700 = vmatpush1.msra.mxu0 0.0
    %701 = vmatprep.subr.mxu0 0.0
    %702 = vmatpush1.msra.mxu0 0.0
    %703 = vmatprep.subr.mxu0 0.0
    %704 = vmatpush1.msra.mxu0 0.0
    %705 = vmatprep.subr.mxu0 0.0
    %706 = vmatpush1.msra.mxu0 0.0
    %707 = vmatprep.subr.mxu0 0.0
    %708 = vmatpush1.msra.mxu0 0.0
    %709 = vmatprep.subr.mxu0 0.0
    %710 = vmatpush1.msra.mxu0 0.0
    %711 = vmatprep.subr.mxu0 0.0
    %712 = vmatpush1.msra.mxu0 0.0
    %713 = vmatprep.subr.mxu0 0.0
    %714 = vmatpush1.msra.mxu0 0.0
    %715 = vmatprep.subr.mxu0 0.0
    %716 = vmatpush1.msra.mxu0 0.0
    %717 = vmatprep.subr.mxu0 0.0
    %718 = vmatpush1.msra.mxu0 0.0
    %719 = vmatprep.subr.mxu0 0.0
    %720 = vmatpush1.msra.mxu0 0.0
    %721 = vmatprep.subr.mxu0 0.0
    %722 = vmatpush1.msra.mxu0 0.0
    %723 = vmatprep.subr.mxu0 0.0
    %724 = vmatpush1.msra.mxu0 0.0
    %725 = vmatprep.subr.mxu0 0.0
    %726 = vmatpush1.msra.mxu0 0.0
    %727 = vmatprep.subr.mxu0 0.0
    %728 = vmatpush1.msra.mxu0 0.0
    %729 = vmatprep.subr.mxu0 0.0
    %730 = vmatpush1.msra.mxu0 0.0
    %731 = vmatprep.subr.mxu0 0.0
    %732 = vmatpush1.msra.mxu0 0.0
    %733 = vmatprep.subr.mxu0 0.0
    %734 = vmatpush1.msra.mxu0 0.0
    %735 = vmatprep.subr.mxu0 0.0
    %736 = vmatpush1.msra.mxu0 0.0
    %737 = vmatprep.subr.mxu0 0.0
    %738 = vmatpush1.msra.mxu0 0.0
    %739 = vmatprep.subr.mxu0 0.0
    %740 = vmatpush1.msra.mxu0 0.0
    %741 = vmatprep.subr.mxu0 0.0
    %742 = vmatpush1.msra.mxu0 0.0
    %743 = vmatprep.subr.mxu0 0.0
    %744 = vmatpush1.msra.mxu0 0.0
    %745 = vmatprep.subr.mxu0 0.0
    %746 = vmatpush1.msra.mxu0 0.0
    %747 = vmatprep.subr.mxu0 0.0
    %748 = vmatpush1.msra.mxu0 0.0
    %749 = vmatprep.mubr.f32.mxu0 0.0
    %750 = vmatmul.mubr.f32.gmra.mrb[0].mxu0 %v683
    %v751 = vpop.f32.mrb[0].mxu0
    %v752 = vadd.f32 0.0, %v751
    %v753 = vpop.f32.mrb[0].mxu0
    %754 = vdwg.mxu0
    %v755 = vadd.f32 %v682, %v752
    %v756 = vxor.u32 %v755, 2147483648
    %v757 = vmul.f32 %v756, 1.442695
    %v758 = vpow.pop %v757
    %v759 = vadd.f32 %v758, 1.0
    %v760 = vrcp.pop %v759
    %v761 = vmul.f32 1.0, %v760
    %v762 = vtanh.pop %v755
    %v763 = vmul.f32 %v761, %v668
    %765 = vrot.lane.b32.xlu0 %v762, 64
    %v766 = vpop.permute.xlu0 %765
    %v768 = vmul.f32 %v761, %v766
    %770 = vrot.lane.b32.xlu0 %v768, 32
    %v771 = vpop.permute.xlu0 %770
    %v773 = vadd.f32 %v763, %v771
    %v774 = vtanh.pop %v773
    %776 = vrot.lane.b32.xlu0 %v774, 64
    %v777 = vpop.permute.xlu0 %776
    %v779 = vmul.f32 %v761, %v777
    %781 = vrot.lane.b32.xlu0 %v779, 32
    %v782 = vpop.permute.xlu0 %781
    %s784 = scalar_lea.vmem [#allocation2], 10
    %785 = vst.msk [vmem:[%s784] sm:$0x3] %vm259, %v782
    %s786 = scalar_lea.vmem [#allocation3], 12
    %v787 = vld [vmem:[%s786] sm:$0x3]
    %v788 = vsel %vm156, %v782, 0
    %790 = vmatprep.subr.mxu0 0.0
    %791 = vmatpush1.msra.mxu0 %v151
    %792 = vmatprep.subr.mxu0 0.0
    %793 = vmatpush1.msra.mxu0 %v152
    %794 = vmatprep.subr.mxu0 0.0
    %795 = vmatpush1.msra.mxu0 %v153
    %796 = vmatprep.subr.mxu0 0.0
    %797 = vmatpush1.msra.mxu0 %v154
    %798 = vmatprep.subr.mxu0 0.0
    %799 = vmatpush1.msra.mxu0 0.0
    %800 = vmatprep.subr.mxu0 0.0
    %801 = vmatpush1.msra.mxu0 0.0
    %802 = vmatprep.subr.mxu0 0.0
    %803 = vmatpush1.msra.mxu0 0.0
    %804 = vmatprep.subr.mxu0 0.0
    %805 = vmatpush1.msra.mxu0 0.0
    %806 = vmatprep.subr.mxu0 0.0
    %807 = vmatpush1.msra.mxu0 0.0
    %808 = vmatprep.subr.mxu0 0.0
    %809 = vmatpush1.msra.mxu0 0.0
    %810 = vmatprep.subr.mxu0 0.0
    %811 = vmatpush1.msra.mxu0 0.0
    %812 = vmatprep.subr.mxu0 0.0
    %813 = vmatpush1.msra.mxu0 0.0
    %814 = vmatprep.subr.mxu0 0.0
    %815 = vmatpush1.msra.mxu0 0.0
    %816 = vmatprep.subr.mxu0 0.0
    %817 = vmatpush1.msra.mxu0 0.0
    %818 = vmatprep.subr.mxu0 0.0
    %819 = vmatpush1.msra.mxu0 0.0
    %820 = vmatprep.subr.mxu0 0.0
    %821 = vmatpush1.msra.mxu0 0.0
    %822 = vmatprep.subr.mxu0 0.0
    %823 = vmatpush1.msra.mxu0 0.0
    %824 = vmatprep.subr.mxu0 0.0
    %825 = vmatpush1.msra.mxu0 0.0
    %826 = vmatprep.subr.mxu0 0.0
    %827 = vmatpush1.msra.mxu0 0.0
    %828 = vmatprep.subr.mxu0 0.0
    %829 = vmatpush1.msra.mxu0 0.0
    %830 = vmatprep.subr.mxu0 0.0
    %831 = vmatpush1.msra.mxu0 0.0
    %832 = vmatprep.subr.mxu0 0.0
    %833 = vmatpush1.msra.mxu0 0.0
    %834 = vmatprep.subr.mxu0 0.0
    %835 = vmatpush1.msra.mxu0 0.0
    %836 = vmatprep.subr.mxu0 0.0
    %837 = vmatpush1.msra.mxu0 0.0
    %838 = vmatprep.subr.mxu0 0.0
    %839 = vmatpush1.msra.mxu0 0.0
    %840 = vmatprep.subr.mxu0 0.0
    %841 = vmatpush1.msra.mxu0 0.0
    %842 = vmatprep.subr.mxu0 0.0
    %843 = vmatpush1.msra.mxu0 0.0
    %844 = vmatprep.subr.mxu0 0.0
    %845 = vmatpush1.msra.mxu0 0.0
    %846 = vmatprep.subr.mxu0 0.0
    %847 = vmatpush1.msra.mxu0 0.0
    %848 = vmatprep.subr.mxu0 0.0
    %849 = vmatpush1.msra.mxu0 0.0
    %850 = vmatprep.subr.mxu0 0.0
    %851 = vmatpush1.msra.mxu0 0.0
    %852 = vmatprep.subr.mxu0 0.0
    %853 = vmatpush1.msra.mxu0 0.0
    %854 = vmatprep.mubr.f32.mxu0 0.0
    %855 = vmatmul.mubr.f32.gmra.mrb[0].mxu0 %v788
    %v856 = vpop.f32.mrb[0].mxu0
    %v857 = vadd.f32 0.0, %v856
    %v858 = vpop.f32.mrb[0].mxu0
    %859 = vdwg.mxu0
    %v860 = vadd.f32 %v787, %v857
    %v861 = vxor.u32 %v860, 2147483648
    %v862 = vmul.f32 %v861, 1.442695
    %v863 = vpow.pop %v862
    %v864 = vadd.f32 %v863, 1.0
    %v865 = vrcp.pop %v864
    %v866 = vmul.f32 1.0, %v865
    %v867 = vtanh.pop %v860
    %v868 = vmul.f32 %v866, %v773
    %870 = vrot.lane.b32.xlu0 %v867, 64
    %v871 = vpop.permute.xlu0 %870
    %v873 = vmul.f32 %v866, %v871
    %875 = vrot.lane.b32.xlu0 %v873, 32
    %v876 = vpop.permute.xlu0 %875
    %v878 = vadd.f32 %v868, %v876
    %v879 = vtanh.pop %v878
    %881 = vrot.lane.b32.xlu0 %v879, 64
    %v882 = vpop.permute.xlu0 %881
    %v884 = vmul.f32 %v866, %v882
    %886 = vrot.lane.b32.xlu0 %v884, 32
    %v887 = vpop.permute.xlu0 %886
    %s889 = scalar_lea.vmem [#allocation2], 12
    %890 = vst.msk [vmem:[%s889] sm:$0x3] %vm259, %v887
    %s891 = scalar_lea.vmem [#allocation3], 14
    %v892 = vld [vmem:[%s891] sm:$0x3]
    %v893 = vsel %vm156, %v887, 0
    %895 = vmatprep.subr.mxu0 0.0
    %896 = vmatpush1.msra.mxu0 %v151
    %897 = vmatprep.subr.mxu0 0.0
    %898 = vmatpush1.msra.mxu0 %v152
    %899 = vmatprep.subr.mxu0 0.0
    %900 = vmatpush1.msra.mxu0 %v153
    %901 = vmatprep.subr.mxu0 0.0
    %902 = vmatpush1.msra.mxu0 %v154
    %903 = vmatprep.subr.mxu0 0.0
    %904 = vmatpush1.msra.mxu0 0.0
    %905 = vmatprep.subr.mxu0 0.0
    %906 = vmatpush1.msra.mxu0 0.0
    %907 = vmatprep.subr.mxu0 0.0
    %908 = vmatpush1.msra.mxu0 0.0
    %909 = vmatprep.subr.mxu0 0.0
    %910 = vmatpush1.msra.mxu0 0.0
    %911 = vmatprep.subr.mxu0 0.0
    %912 = vmatpush1.msra.mxu0 0.0
    %913 = vmatprep.subr.mxu0 0.0
    %914 = vmatpush1.msra.mxu0 0.0
    %915 = vmatprep.subr.mxu0 0.0
    %916 = vmatpush1.msra.mxu0 0.0
    %917 = vmatprep.subr.mxu0 0.0
    %918 = vmatpush1.msra.mxu0 0.0
    %919 = vmatprep.subr.mxu0 0.0
    %920 = vmatpush1.msra.mxu0 0.0
    %921 = vmatprep.subr.mxu0 0.0
    %922 = vmatpush1.msra.mxu0 0.0
    %923 = vmatprep.subr.mxu0 0.0
    %924 = vmatpush1.msra.mxu0 0.0
    %925 = vmatprep.subr.mxu0 0.0
    %926 = vmatpush1.msra.mxu0 0.0
    %927 = vmatprep.subr.mxu0 0.0
    %928 = vmatpush1.msra.mxu0 0.0
    %929 = vmatprep.subr.mxu0 0.0
    %930 = vmatpush1.msra.mxu0 0.0
    %931 = vmatprep.subr.mxu0 0.0
    %932 = vmatpush1.msra.mxu0 0.0
    %933 = vmatprep.subr.mxu0 0.0
    %934 = vmatpush1.msra.mxu0 0.0
    %935 = vmatprep.subr.mxu0 0.0
    %936 = vmatpush1.msra.mxu0 0.0
    %937 = vmatprep.subr.mxu0 0.0
    %938 = vmatpush1.msra.mxu0 0.0
    %939 = vmatprep.subr.mxu0 0.0
    %940 = vmatpush1.msra.mxu0 0.0
    %941 = vmatprep.subr.mxu0 0.0
    %942 = vmatpush1.msra.mxu0 0.0
    %943 = vmatprep.subr.mxu0 0.0
    %944 = vmatpush1.msra.mxu0 0.0
    %945 = vmatprep.subr.mxu0 0.0
    %946 = vmatpush1.msra.mxu0 0.0
    %947 = vmatprep.subr.mxu0 0.0
    %948 = vmatpush1.msra.mxu0 0.0
    %949 = vmatprep.subr.mxu0 0.0
    %950 = vmatpush1.msra.mxu0 0.0
    %951 = vmatprep.subr.mxu0 0.0
    %952 = vmatpush1.msra.mxu0 0.0
    %953 = vmatprep.subr.mxu0 0.0
    %954 = vmatpush1.msra.mxu0 0.0
    %955 = vmatprep.subr.mxu0 0.0
    %956 = vmatpush1.msra.mxu0 0.0
    %957 = vmatprep.subr.mxu0 0.0
    %958 = vmatpush1.msra.mxu0 0.0
    %959 = vmatprep.mubr.f32.mxu0 0.0
    %960 = vmatmul.mubr.f32.gmra.mrb[0].mxu0 %v893
    %v961 = vpop.f32.mrb[0].mxu0
    %v962 = vadd.f32 0.0, %v961
    %v963 = vpop.f32.mrb[0].mxu0
    %964 = vdwg.mxu0
    %v965 = vadd.f32 %v892, %v962
    %v966 = vxor.u32 %v965, 2147483648
    %v967 = vmul.f32 %v966, 1.442695
    %v968 = vpow.pop %v967
    %v969 = vadd.f32 %v968, 1.0
    %v970 = vrcp.pop %v969
    %v971 = vmul.f32 1.0, %v970
    %v972 = vtanh.pop %v965
    %v973 = vmul.f32 %v971, %v878
    %975 = vrot.lane.b32.xlu0 %v972, 64
    %v976 = vpop.permute.xlu0 %975
    %v978 = vmul.f32 %v971, %v976
    %980 = vrot.lane.b32.xlu0 %v978, 32
    %v981 = vpop.permute.xlu0 %980
    %v983 = vadd.f32 %v973, %v981
    %v984 = vtanh.pop %v983
    %986 = vrot.lane.b32.xlu0 %v984, 64
    %v987 = vpop.permute.xlu0 %986
    %v989 = vmul.f32 %v971, %v987
    %991 = vrot.lane.b32.xlu0 %v989, 32
    %v992 = vpop.permute.xlu0 %991
    %s994 = scalar_lea.vmem [#allocation2], 14
    %995 = vst.msk [vmem:[%s994] sm:$0x3] %vm259, %v992
    %v996 = vld [vmem:[#allocation2] sm:$0xff]
    %v997 = vld [vmem:[#allocation2 + $0x8] sm:$0xff]
    %v998 = vld [vmem:[%s4] sm:$0xff]
    %v999 = vld [vmem:[%s4 + $0x8] sm:$0xff]
    %v1000 = vld [vmem:[%s4 + $0x10] sm:$0xff]
    %v1001 = vld [vmem:[%s4 + $0x18] sm:$0xff]
    %v1002 = vld [vmem:[%s6] sm:$0x1]
    %v1004 = vlaneseq
    %v1005 = vshrl.u32 %v1004, 7
    %v1006 = vsub.s32 0, %v1005
    %v1007 = vrot.slane %v1002, %v1006
    %v1010 = vsel %vm156, %v996, 0
    %v1013 = vsel %vm156, %v997, 0
    %1015 = vmatprep.subr.mxu0 0.0
    %1016 = vmatpush1.msra.mxu0 %v998
    %1017 = vmatprep.subr.mxu0 0.0
    %1018 = vmatpush1.msra.mxu0 %v999
    %1019 = vmatprep.subr.mxu0 0.0
    %1020 = vmatpush1.msra.mxu0 %v1000
    %1021 = vmatprep.subr.mxu0 0.0
    %1022 = vmatpush1.msra.mxu0 %v1001
    %1023 = vmatprep.subr.mxu0 0.0
    %1024 = vmatpush1.msra.mxu0 0.0
    %1025 = vmatprep.subr.mxu0 0.0
    %1026 = vmatpush1.msra.mxu0 0.0
    %1027 = vmatprep.subr.mxu0 0.0
    %1028 = vmatpush1.msra.mxu0 0.0
    %1029 = vmatprep.subr.mxu0 0.0
    %1030 = vmatpush1.msra.mxu0 0.0
    %1031 = vmatprep.subr.mxu0 0.0
    %1032 = vmatpush1.msra.mxu0 0.0
    %1033 = vmatprep.subr.mxu0 0.0
    %1034 = vmatpush1.msra.mxu0 0.0
    %1035 = vmatprep.subr.mxu0 0.0
    %1036 = vmatpush1.msra.mxu0 0.0
    %1037 = vmatprep.subr.mxu0 0.0
    %1038 = vmatpush1.msra.mxu0 0.0
    %1039 = vmatprep.subr.mxu0 0.0
    %1040 = vmatpush1.msra.mxu0 0.0
    %1041 = vmatprep.subr.mxu0 0.0
    %1042 = vmatpush1.msra.mxu0 0.0
    %1043 = vmatprep.subr.mxu0 0.0
    %1044 = vmatpush1.msra.mxu0 0.0
    %1045 = vmatprep.subr.mxu0 0.0
    %1046 = vmatpush1.msra.mxu0 0.0
    %1047 = vmatprep.subr.mxu0 0.0
    %1048 = vmatpush1.msra.mxu0 0.0
    %1049 = vmatprep.subr.mxu0 0.0
    %1050 = vmatpush1.msra.mxu0 0.0
    %1051 = vmatprep.subr.mxu0 0.0
    %1052 = vmatpush1.msra.mxu0 0.0
    %1053 = vmatprep.subr.mxu0 0.0
    %1054 = vmatpush1.msra.mxu0 0.0
    %1055 = vmatprep.subr.mxu0 0.0
    %1056 = vmatpush1.msra.mxu0 0.0
    %1057 = vmatprep.subr.mxu0 0.0
    %1058 = vmatpush1.msra.mxu0 0.0
    %1059 = vmatprep.subr.mxu0 0.0
    %1060 = vmatpush1.msra.mxu0 0.0
    %1061 = vmatprep.subr.mxu0 0.0
    %1062 = vmatpush1.msra.mxu0 0.0
    %1063 = vmatprep.subr.mxu0 0.0
    %1064 = vmatpush1.msra.mxu0 0.0
    %1065 = vmatprep.subr.mxu0 0.0
    %1066 = vmatpush1.msra.mxu0 0.0
    %1067 = vmatprep.subr.mxu0 0.0
    %1068 = vmatpush1.msra.mxu0 0.0
    %1069 = vmatprep.subr.mxu0 0.0
    %1070 = vmatpush1.msra.mxu0 0.0
    %1071 = vmatprep.subr.mxu0 0.0
    %1072 = vmatpush1.msra.mxu0 0.0
    %1073 = vmatprep.subr.mxu0 0.0
    %1074 = vmatpush1.msra.mxu0 0.0
    %1075 = vmatprep.subr.mxu0 0.0
    %1076 = vmatpush1.msra.mxu0 0.0
    %1077 = vmatprep.subr.mxu0 0.0
    %1078 = vmatpush1.msra.mxu0 0.0
    %1079 = vmatprep.mubr.f32.mxu0 0.0
    %1080 = vmatmul.mubr.f32.gmra.mrb[0].mxu0 %v1010
    %v1081 = vpop.f32.mrb[0].mxu0
    %v1082 = vadd.f32 %v1007, %v1081
    %v1083 = vpop.f32.mrb[0].mxu0
    %1084 = vmatprep.mubr.f32.mxu0 0.0
    %1085 = vmatmul.mubr.f32.gmra.mrb[0].mxu0 %v1013
    %v1086 = vpop.f32.mrb[0].mxu0
    %v1087 = vadd.f32 %v1007, %v1086
    %v1088 = vpop.f32.mrb[0].mxu0
    %1089 = vdwg.mxu0
    %1090 = vst [vmem:[#allocation3] sm:$0xff] %v1082
    %1091 = vst [vmem:[#allocation3 + $0x8] sm:$0xff] %v1087
    %v1092 = vld [vmem:[%s5] sm:$0xff]
    %v1093 = vld [vmem:[%s5 + $0x8] sm:$0xff]
    %v1094 = vld [vmem:[%s5 + $0x10] sm:$0xff]
    %v1095 = vld [vmem:[%s5 + $0x18] sm:$0xff]
    %v1096 = vld [vmem:[#allocation3] sm:$0x3]
    %1097 = vmatprep.subr.mxu0 0.0
    %1098 = vmatpush1.msra.mxu0 %v1092
    %1099 = vmatprep.subr.mxu0 0.0
    %1100 = vmatpush1.msra.mxu0 %v1093
    %1101 = vmatprep.subr.mxu0 0.0
    %1102 = vmatpush1.msra.mxu0 %v1094
    %1103 = vmatprep.subr.mxu0 0.0
    %1104 = vmatpush1.msra.mxu0 %v1095
    %1105 = vmatprep.subr.mxu0 0.0
    %1106 = vmatpush1.msra.mxu0 0.0
    %1107 = vmatprep.subr.mxu0 0.0
    %1108 = vmatpush1.msra.mxu0 0.0
    %1109 = vmatprep.subr.mxu0 0.0
    %1110 = vmatpush1.msra.mxu0 0.0
    %1111 = vmatprep.subr.mxu0 0.0
    %1112 = vmatpush1.msra.mxu0 0.0
    %1113 = vmatprep.subr.mxu0 0.0
    %1114 = vmatpush1.msra.mxu0 0.0
    %1115 = vmatprep.subr.mxu0 0.0
    %1116 = vmatpush1.msra.mxu0 0.0
    %1117 = vmatprep.subr.mxu0 0.0
    %1118 = vmatpush1.msra.mxu0 0.0
    %1119 = vmatprep.subr.mxu0 0.0
    %1120 = vmatpush1.msra.mxu0 0.0
    %1121 = vmatprep.subr.mxu0 0.0
    %1122 = vmatpush1.msra.mxu0 0.0
    %1123 = vmatprep.subr.mxu0 0.0
    %1124 = vmatpush1.msra.mxu0 0.0
    %1125 = vmatprep.subr.mxu0 0.0
    %1126 = vmatpush1.msra.mxu0 0.0
    %1127 = vmatprep.subr.mxu0 0.0
    %1128 = vmatpush1.msra.mxu0 0.0
    %1129 = vmatprep.subr.mxu0 0.0
    %1130 = vmatpush1.msra.mxu0 0.0
    %1131 = vmatprep.subr.mxu0 0.0
    %1132 = vmatpush1.msra.mxu0 0.0
    %1133 = vmatprep.subr.mxu0 0.0
    %1134 = vmatpush1.msra.mxu0 0.0
    %1135 = vmatprep.subr.mxu0 0.0
    %1136 = vmatpush1.msra.mxu0 0.0
    %1137 = vmatprep.subr.mxu0 0.0
    %1138 = vmatpush1.msra.mxu0 0.0
    %1139 = vmatprep.subr.mxu0 0.0
    %1140 = vmatpush1.msra.mxu0 0.0
    %1141 = vmatprep.subr.mxu0 0.0
    %1142 = vmatpush1.msra.mxu0 0.0
    %1143 = vmatprep.subr.mxu0 0.0
    %1144 = vmatpush1.msra.mxu0 0.0
    %1145 = vmatprep.subr.mxu0 0.0
    %1146 = vmatpush1.msra.mxu0 0.0
    %1147 = vmatprep.subr.mxu0 0.0
    %1148 = vmatpush1.msra.mxu0 0.0
    %1149 = vmatprep.subr.mxu0 0.0
    %1150 = vmatpush1.msra.mxu0 0.0
    %1151 = vmatprep.subr.mxu0 0.0
    %1152 = vmatpush1.msra.mxu0 0.0
    %1153 = vmatprep.subr.mxu0 0.0
    %1154 = vmatpush1.msra.mxu0 0.0
    %1155 = vmatprep.subr.mxu0 0.0
    %1156 = vmatpush1.msra.mxu0 0.0
    %1157 = vmatprep.subr.mxu0 0.0
    %1158 = vmatpush1.msra.mxu0 0.0
    %1159 = vmatprep.subr.mxu0 0.0
    %1160 = vmatpush1.msra.mxu0 0.0
    %1161 = vmatprep.mubr.f32.mxu0 0.0
    %1162 = vmatmul.mubr.f32.gmra.mrb[0].mxu0 %v158
    %v1163 = vpop.f32.mrb[0].mxu0
    %v1164 = vadd.f32 0.0, %v1163
    %v1165 = vpop.f32.mrb[0].mxu0
    %1166 = vdwg.mxu0
    %v1167 = vadd.f32 %v1096, %v1164
    %v1168 = vxor.u32 %v1167, 2147483648
    %v1169 = vmul.f32 %v1168, 1.442695
    %v1170 = vpow.pop %v1169
    %v1171 = vadd.f32 %v1170, 1.0
    %v1172 = vrcp.pop %v1171
    %v1173 = vmul.f32 1.0, %v1172
    %v1174 = vtanh.pop %v1167
    %v1175 = vmul.f32 %v1173, 0.0
    %1177 = vrot.lane.b32.xlu0 %v1174, 64
    %v1178 = vpop.permute.xlu0 %1177
    %v1180 = vmul.f32 %v1173, %v1178
    %1182 = vrot.lane.b32.xlu0 %v1180, 32
    %v1183 = vpop.permute.xlu0 %1182
    %v1185 = vadd.f32 %v1175, %v1183
    %v1186 = vtanh.pop %v1185
    %1188 = vrot.lane.b32.xlu0 %v1186, 64
    %v1189 = vpop.permute.xlu0 %1188
    %v1191 = vmul.f32 %v1173, %v1189
    %v1192 = vld [vmem:[%s261] sm:$0x3]
    %1194 = vrot.lane.b32.xlu0 %v1191, 32
    %v1195 = vpop.permute.xlu0 %1194
    %v1196 = vsel %vm156, %v1195, 0
    %1198 = vmatprep.subr.mxu0 0.0
    %1199 = vmatpush1.msra.mxu0 %v1092
    %1200 = vmatprep.subr.mxu0 0.0
    %1201 = vmatpush1.msra.mxu0 %v1093
    %1202 = vmatprep.subr.mxu0 0.0
    %1203 = vmatpush1.msra.mxu0 %v1094
    %1204 = vmatprep.subr.mxu0 0.0
    %1205 = vmatpush1.msra.mxu0 %v1095
    %1206 = vmatprep.subr.mxu0 0.0
    %1207 = vmatpush1.msra.mxu0 0.0
    %1208 = vmatprep.subr.mxu0 0.0
    %1209 = vmatpush1.msra.mxu0 0.0
    %1210 = vmatprep.subr.mxu0 0.0
    %1211 = vmatpush1.msra.mxu0 0.0
    %1212 = vmatprep.subr.mxu0 0.0
    %1213 = vmatpush1.msra.mxu0 0.0
    %1214 = vmatprep.subr.mxu0 0.0
    %1215 = vmatpush1.msra.mxu0 0.0
    %1216 = vmatprep.subr.mxu0 0.0
    %1217 = vmatpush1.msra.mxu0 0.0
    %1218 = vmatprep.subr.mxu0 0.0
    %1219 = vmatpush1.msra.mxu0 0.0
    %1220 = vmatprep.subr.mxu0 0.0
    %1221 = vmatpush1.msra.mxu0 0.0
    %1222 = vmatprep.subr.mxu0 0.0
    %1223 = vmatpush1.msra.mxu0 0.0
    %1224 = vmatprep.subr.mxu0 0.0
    %1225 = vmatpush1.msra.mxu0 0.0
    %1226 = vmatprep.subr.mxu0 0.0
    %1227 = vmatpush1.msra.mxu0 0.0
    %1228 = vmatprep.subr.mxu0 0.0
    %1229 = vmatpush1.msra.mxu0 0.0
    %1230 = vmatprep.subr.mxu0 0.0
    %1231 = vmatpush1.msra.mxu0 0.0
    %1232 = vmatprep.subr.mxu0 0.0
    %1233 = vmatpush1.msra.mxu0 0.0
    %1234 = vmatprep.subr.mxu0 0.0
    %1235 = vmatpush1.msra.mxu0 0.0
    %1236 = vmatprep.subr.mxu0 0.0
    %1237 = vmatpush1.msra.mxu0 0.0
    %1238 = vmatprep.subr.mxu0 0.0
    %1239 = vmatpush1.msra.mxu0 0.0
    %1240 = vmatprep.subr.mxu0 0.0
    %1241 = vmatpush1.msra.mxu0 0.0
    %1242 = vmatprep.subr.mxu0 0.0
    %1243 = vmatpush1.msra.mxu0 0.0
    %1244 = vmatprep.subr.mxu0 0.0
    %1245 = vmatpush1.msra.mxu0 0.0
    %1246 = vmatprep.subr.mxu0 0.0
    %1247 = vmatpush1.msra.mxu0 0.0
    %1248 = vmatprep.subr.mxu0 0.0
    %1249 = vmatpush1.msra.mxu0 0.0
    %1250 = vmatprep.subr.mxu0 0.0
    %1251 = vmatpush1.msra.mxu0 0.0
    %1252 = vmatprep.subr.mxu0 0.0
    %1253 = vmatpush1.msra.mxu0 0.0
    %1254 = vmatprep.subr.mxu0 0.0
    %1255 = vmatpush1.msra.mxu0 0.0
    %1256 = vmatprep.subr.mxu0 0.0
    %1257 = vmatpush1.msra.mxu0 0.0
    %1258 = vmatprep.subr.mxu0 0.0
    %1259 = vmatpush1.msra.mxu0 0.0
    %1260 = vmatprep.subr.mxu0 0.0
    %1261 = vmatpush1.msra.mxu0 0.0
    %1262 = vmatprep.mubr.f32.mxu0 0.0
    %1263 = vmatmul.mubr.f32.gmra.mrb[0].mxu0 %v1196
    %v1264 = vpop.f32.mrb[0].mxu0
    %v1265 = vadd.f32 0.0, %v1264
    %v1266 = vpop.f32.mrb[0].mxu0
    %1267 = vdwg.mxu0
    %v1268 = vadd.f32 %v1192, %v1265
    %v1269 = vxor.u32 %v1268, 2147483648
    %v1270 = vmul.f32 %v1269, 1.442695
    %v1271 = vpow.pop %v1270
    %v1272 = vadd.f32 %v1271, 1.0
    %v1273 = vrcp.pop %v1272
    %v1274 = vmul.f32 1.0, %v1273
    %v1275 = vtanh.pop %v1268
    %v1276 = vmul.f32 %v1274, %v1185
    %1278 = vrot.lane.b32.xlu0 %v1275, 64
    %v1279 = vpop.permute.xlu0 %1278
    %v1281 = vmul.f32 %v1274, %v1279
    %1283 = vrot.lane.b32.xlu0 %v1281, 32
    %v1284 = vpop.permute.xlu0 %1283
    %v1286 = vadd.f32 %v1276, %v1284
    %v1287 = vtanh.pop %v1286
    %1289 = vrot.lane.b32.xlu0 %v1287, 64
    %v1290 = vpop.permute.xlu0 %1289
    %v1292 = vmul.f32 %v1274, %v1290
    %v1293 = vld [vmem:[%s366] sm:$0x3]
    %1295 = vrot.lane.b32.xlu0 %v1292, 32
    %v1296 = vpop.permute.xlu0 %1295
    %v1297 = vsel %vm156, %v1296, 0
    %1299 = vmatprep.subr.mxu0 0.0
    %1300 = vmatpush1.msra.mxu0 %v1092
    %1301 = vmatprep.subr.mxu0 0.0
    %1302 = vmatpush1.msra.mxu0 %v1093
    %1303 = vmatprep.subr.mxu0 0.0
    %1304 = vmatpush1.msra.mxu0 %v1094
    %1305 = vmatprep.subr.mxu0 0.0
    %1306 = vmatpush1.msra.mxu0 %v1095
    %1307 = vmatprep.subr.mxu0 0.0
    %1308 = vmatpush1.msra.mxu0 0.0
    %1309 = vmatprep.subr.mxu0 0.0
    %1310 = vmatpush1.msra.mxu0 0.0
    %1311 = vmatprep.subr.mxu0 0.0
    %1312 = vmatpush1.msra.mxu0 0.0
    %1313 = vmatprep.subr.mxu0 0.0
    %1314 = vmatpush1.msra.mxu0 0.0
    %1315 = vmatprep.subr.mxu0 0.0
    %1316 = vmatpush1.msra.mxu0 0.0
    %1317 = vmatprep.subr.mxu0 0.0
    %1318 = vmatpush1.msra.mxu0 0.0
    %1319 = vmatprep.subr.mxu0 0.0
    %1320 = vmatpush1.msra.mxu0 0.0
    %1321 = vmatprep.subr.mxu0 0.0
    %1322 = vmatpush1.msra.mxu0 0.0
    %1323 = vmatprep.subr.mxu0 0.0
    %1324 = vmatpush1.msra.mxu0 0.0
    %1325 = vmatprep.subr.mxu0 0.0
    %1326 = vmatpush1.msra.mxu0 0.0
    %1327 = vmatprep.subr.mxu0 0.0
    %1328 = vmatpush1.msra.mxu0 0.0
    %1329 = vmatprep.subr.mxu0 0.0
    %1330 = vmatpush1.msra.mxu0 0.0
    %1331 = vmatprep.subr.mxu0 0.0
    %1332 = vmatpush1.msra.mxu0 0.0
    %1333 = vmatprep.subr.mxu0 0.0
    %1334 = vmatpush1.msra.mxu0 0.0
    %1335 = vmatprep.subr.mxu0 0.0
    %1336 = vmatpush1.msra.mxu0 0.0
    %1337 = vmatprep.subr.mxu0 0.0
    %1338 = vmatpush1.msra.mxu0 0.0
    %1339 = vmatprep.subr.mxu0 0.0
    %1340 = vmatpush1.msra.mxu0 0.0
    %1341 = vmatprep.subr.mxu0 0.0
    %1342 = vmatpush1.msra.mxu0 0.0
    %1343 = vmatprep.subr.mxu0 0.0
    %1344 = vmatpush1.msra.mxu0 0.0
    %1345 = vmatprep.subr.mxu0 0.0
    %1346 = vmatpush1.msra.mxu0 0.0
    %1347 = vmatprep.subr.mxu0 0.0
    %1348 = vmatpush1.msra.mxu0 0.0
    %1349 = vmatprep.subr.mxu0 0.0
    %1350 = vmatpush1.msra.mxu0 0.0
    %1351 = vmatprep.subr.mxu0 0.0
    %1352 = vmatpush1.msra.mxu0 0.0
    %1353 = vmatprep.subr.mxu0 0.0
    %1354 = vmatpush1.msra.mxu0 0.0
    %1355 = vmatprep.subr.mxu0 0.0
    %1356 = vmatpush1.msra.mxu0 0.0
    %1357 = vmatprep.subr.mxu0 0.0
    %1358 = vmatpush1.msra.mxu0 0.0
    %1359 = vmatprep.subr.mxu0 0.0
    %1360 = vmatpush1.msra.mxu0 0.0
    %1361 = vmatprep.subr.mxu0 0.0
    %1362 = vmatpush1.msra.mxu0 0.0
    %1363 = vmatprep.mubr.f32.mxu0 0.0
    %1364 = vmatmul.mubr.f32.gmra.mrb[0].mxu0 %v1297
    %v1365 = vpop.f32.mrb[0].mxu0
    %v1366 = vadd.f32 0.0, %v1365
    %v1367 = vpop.f32.mrb[0].mxu0
    %1368 = vdwg.mxu0
    %v1369 = vadd.f32 %v1293, %v1366
    %v1370 = vxor.u32 %v1369, 2147483648
    %v1371 = vmul.f32 %v1370, 1.442695
    %v1372 = vpow.pop %v1371
    %v1373 = vadd.f32 %v1372, 1.0
    %v1374 = vrcp.pop %v1373
    %v1375 = vmul.f32 1.0, %v1374
    %v1376 = vtanh.pop %v1369
    %v1377 = vmul.f32 %v1375, %v1286
    %1379 = vrot.lane.b32.xlu0 %v1376, 64
    %v1380 = vpop.permute.xlu0 %1379
    %v1382 = vmul.f32 %v1375, %v1380
    %1384 = vrot.lane.b32.xlu0 %v1382, 32
    %v1385 = vpop.permute.xlu0 %1384
    %v1387 = vadd.f32 %v1377, %v1385
    %v1388 = vtanh.pop %v1387
    %1390 = vrot.lane.b32.xlu0 %v1388, 64
    %v1391 = vpop.permute.xlu0 %1390
    %v1393 = vmul.f32 %v1375, %v1391
    %v1394 = vld [vmem:[%s471] sm:$0x3]
    %1396 = vrot.lane.b32.xlu0 %v1393, 32
    %v1397 = vpop.permute.xlu0 %1396
    %v1398 = vsel %vm156, %v1397, 0
    %1400 = vmatprep.subr.mxu0 0.0
    %1401 = vmatpush1.msra.mxu0 %v1092
    %1402 = vmatprep.subr.mxu0 0.0
    %1403 = vmatpush1.msra.mxu0 %v1093
    %1404 = vmatprep.subr.mxu0 0.0
    %1405 = vmatpush1.msra.mxu0 %v1094
    %1406 = vmatprep.subr.mxu0 0.0
    %1407 = vmatpush1.msra.mxu0 %v1095
    %1408 = vmatprep.subr.mxu0 0.0
    %1409 = vmatpush1.msra.mxu0 0.0
    %1410 = vmatprep.subr.mxu0 0.0
    %1411 = vmatpush1.msra.mxu0 0.0
    %1412 = vmatprep.subr.mxu0 0.0
    %1413 = vmatpush1.msra.mxu0 0.0
    %1414 = vmatprep.subr.mxu0 0.0
    %1415 = vmatpush1.msra.mxu0 0.0
    %1416 = vmatprep.subr.mxu0 0.0
    %1417 = vmatpush1.msra.mxu0 0.0
    %1418 = vmatprep.subr.mxu0 0.0
    %1419 = vmatpush1.msra.mxu0 0.0
    %1420 = vmatprep.subr.mxu0 0.0
    %1421 = vmatpush1.msra.mxu0 0.0
    %1422 = vmatprep.subr.mxu0 0.0
    %1423 = vmatpush1.msra.mxu0 0.0
    %1424 = vmatprep.subr.mxu0 0.0
    %1425 = vmatpush1.msra.mxu0 0.0
    %1426 = vmatprep.subr.mxu0 0.0
    %1427 = vmatpush1.msra.mxu0 0.0
    %1428 = vmatprep.subr.mxu0 0.0
    %1429 = vmatpush1.msra.mxu0 0.0
    %1430 = vmatprep.subr.mxu0 0.0
    %1431 = vmatpush1.msra.mxu0 0.0
    %1432 = vmatprep.subr.mxu0 0.0
    %1433 = vmatpush1.msra.mxu0 0.0
    %1434 = vmatprep.subr.mxu0 0.0
    %1435 = vmatpush1.msra.mxu0 0.0
    %1436 = vmatprep.subr.mxu0 0.0
    %1437 = vmatpush1.msra.mxu0 0.0
    %1438 = vmatprep.subr.mxu0 0.0
    %1439 = vmatpush1.msra.mxu0 0.0
    %1440 = vmatprep.subr.mxu0 0.0
    %1441 = vmatpush1.msra.mxu0 0.0
    %1442 = vmatprep.subr.mxu0 0.0
    %1443 = vmatpush1.msra.mxu0 0.0
    %1444 = vmatprep.subr.mxu0 0.0
    %1445 = vmatpush1.msra.mxu0 0.0
    %1446 = vmatprep.subr.mxu0 0.0
    %1447 = vmatpush1.msra.mxu0 0.0
    %1448 = vmatprep.subr.mxu0 0.0
    %1449 = vmatpush1.msra.mxu0 0.0
    %1450 = vmatprep.subr.mxu0 0.0
    %1451 = vmatpush1.msra.mxu0 0.0
    %1452 = vmatprep.subr.mxu0 0.0
    %1453 = vmatpush1.msra.mxu0 0.0
    %1454 = vmatprep.subr.mxu0 0.0
    %1455 = vmatpush1.msra.mxu0 0.0
    %1456 = vmatprep.subr.mxu0 0.0
    %1457 = vmatpush1.msra.mxu0 0.0
    %1458 = vmatprep.subr.mxu0 0.0
    %1459 = vmatpush1.msra.mxu0 0.0
    %1460 = vmatprep.subr.mxu0 0.0
    %1461 = vmatpush1.msra.mxu0 0.0
    %1462 = vmatprep.subr.mxu0 0.0
    %1463 = vmatpush1.msra.mxu0 0.0
    %1464 = vmatprep.mubr.f32.mxu0 0.0
    %1465 = vmatmul.mubr.f32.gmra.mrb[0].mxu0 %v1398
    %v1466 = vpop.f32.mrb[0].mxu0
    %v1467 = vadd.f32 0.0, %v1466
    %v1468 = vpop.f32.mrb[0].mxu0
    %1469 = vdwg.mxu0
    %v1470 = vadd.f32 %v1394, %v1467
    %v1471 = vxor.u32 %v1470, 2147483648
    %v1472 = vmul.f32 %v1471, 1.442695
    %v1473 = vpow.pop %v1472
    %v1474 = vadd.f32 %v1473, 1.0
    %v1475 = vrcp.pop %v1474
    %v1476 = vmul.f32 1.0, %v1475
    %v1477 = vtanh.pop %v1470
    %v1478 = vmul.f32 %v1476, %v1387
    %1480 = vrot.lane.b32.xlu0 %v1477, 64
    %v1481 = vpop.permute.xlu0 %1480
    %v1483 = vmul.f32 %v1476, %v1481
    %1485 = vrot.lane.b32.xlu0 %v1483, 32
    %v1486 = vpop.permute.xlu0 %1485
    %v1488 = vadd.f32 %v1478, %v1486
    %v1489 = vtanh.pop %v1488
    %1491 = vrot.lane.b32.xlu0 %v1489, 64
    %v1492 = vpop.permute.xlu0 %1491
    %v1494 = vmul.f32 %v1476, %v1492
    %v1495 = vld [vmem:[%s576] sm:$0x3]
    %1497 = vrot.lane.b32.xlu0 %v1494, 32
    %v1498 = vpop.permute.xlu0 %1497
    %v1499 = vsel %vm156, %v1498, 0
    %1501 = vmatprep.subr.mxu0 0.0
    %1502 = vmatpush1.msra.mxu0 %v1092
    %1503 = vmatprep.subr.mxu0 0.0
    %1504 = vmatpush1.msra.mxu0 %v1093
    %1505 = vmatprep.subr.mxu0 0.0
    %1506 = vmatpush1.msra.mxu0 %v1094
    %1507 = vmatprep.subr.mxu0 0.0
    %1508 = vmatpush1.msra.mxu0 %v1095
    %1509 = vmatprep.subr.mxu0 0.0
    %1510 = vmatpush1.msra.mxu0 0.0
    %1511 = vmatprep.subr.mxu0 0.0
    %1512 = vmatpush1.msra.mxu0 0.0
    %1513 = vmatprep.subr.mxu0 0.0
    %1514 = vmatpush1.msra.mxu0 0.0
    %1515 = vmatprep.subr.mxu0 0.0
    %1516 = vmatpush1.msra.mxu0 0.0
    %1517 = vmatprep.subr.mxu0 0.0
    %1518 = vmatpush1.msra.mxu0 0.0
    %1519 = vmatprep.subr.mxu0 0.0
    %1520 = vmatpush1.msra.mxu0 0.0
    %1521 = vmatprep.subr.mxu0 0.0
    %1522 = vmatpush1.msra.mxu0 0.0
    %1523 = vmatprep.subr.mxu0 0.0
    %1524 = vmatpush1.msra.mxu0 0.0
    %1525 = vmatprep.subr.mxu0 0.0
    %1526 = vmatpush1.msra.mxu0 0.0
    %1527 = vmatprep.subr.mxu0 0.0
    %1528 = vmatpush1.msra.mxu0 0.0
    %1529 = vmatprep.subr.mxu0 0.0
    %1530 = vmatpush1.msra.mxu0 0.0
    %1531 = vmatprep.subr.mxu0 0.0
    %1532 = vmatpush1.msra.mxu0 0.0
    %1533 = vmatprep.subr.mxu0 0.0
    %1534 = vmatpush1.msra.mxu0 0.0
    %1535 = vmatprep.subr.mxu0 0.0
    %1536 = vmatpush1.msra.mxu0 0.0
    %1537 = vmatprep.subr.mxu0 0.0
    %1538 = vmatpush1.msra.mxu0 0.0
    %1539 = vmatprep.subr.mxu0 0.0
    %1540 = vmatpush1.msra.mxu0 0.0
    %1541 = vmatprep.subr.mxu0 0.0
    %1542 = vmatpush1.msra.mxu0 0.0
    %1543 = vmatprep.subr.mxu0 0.0
    %1544 = vmatpush1.msra.mxu0 0.0
    %1545 = vmatprep.subr.mxu0 0.0
    %1546 = vmatpush1.msra.mxu0 0.0
    %1547 = vmatprep.subr.mxu0 0.0
    %1548 = vmatpush1.msra.mxu0 0.0
    %1549 = vmatprep.subr.mxu0 0.0
    %1550 = vmatpush1.msra.mxu0 0.0
    %1551 = vmatprep.subr.mxu0 0.0
    %1552 = vmatpush1.msra.mxu0 0.0
    %1553 = vmatprep.subr.mxu0 0.0
    %1554 = vmatpush1.msra.mxu0 0.0
    %1555 = vmatprep.subr.mxu0 0.0
    %1556 = vmatpush1.msra.mxu0 0.0
    %1557 = vmatprep.subr.mxu0 0.0
    %1558 = vmatpush1.msra.mxu0 0.0
    %1559 = vmatprep.subr.mxu0 0.0
    %1560 = vmatpush1.msra.mxu0 0.0
    %1561 = vmatprep.subr.mxu0 0.0
    %1562 = vmatpush1.msra.mxu0 0.0
    %1563 = vmatprep.subr.mxu0 0.0
    %1564 = vmatpush1.msra.mxu0 0.0
    %1565 = vmatprep.mubr.f32.mxu0 0.0
    %1566 = vmatmul.mubr.f32.gmra.mrb[0].mxu0 %v1499
    %v1567 = vpop.f32.mrb[0].mxu0
    %v1568 = vadd.f32 0.0, %v1567
    %v1569 = vpop.f32.mrb[0].mxu0
    %1570 = vdwg.mxu0
    %v1571 = vadd.f32 %v1495, %v1568
    %v1572 = vxor.u32 %v1571, 2147483648
    %v1573 = vmul.f32 %v1572, 1.442695
    %v1574 = vpow.pop %v1573
    %v1575 = vadd.f32 %v1574, 1.0
    %v1576 = vrcp.pop %v1575
    %v1577 = vmul.f32 1.0, %v1576
    %v1578 = vtanh.pop %v1571
    %v1579 = vmul.f32 %v1577, %v1488
    %1581 = vrot.lane.b32.xlu0 %v1578, 64
    %v1582 = vpop.permute.xlu0 %1581
    %v1584 = vmul.f32 %v1577, %v1582
    %1586 = vrot.lane.b32.xlu0 %v1584, 32
    %v1587 = vpop.permute.xlu0 %1586
    %v1589 = vadd.f32 %v1579, %v1587
    %v1590 = vtanh.pop %v1589
    %1592 = vrot.lane.b32.xlu0 %v1590, 64
    %v1593 = vpop.permute.xlu0 %1592
    %v1595 = vmul.f32 %v1577, %v1593
    %v1596 = vld [vmem:[%s681] sm:$0x3]
    %1598 = vrot.lane.b32.xlu0 %v1595, 32
    %v1599 = vpop.permute.xlu0 %1598
    %v1600 = vsel %vm156, %v1599, 0
    %1602 = vmatprep.subr.mxu0 0.0
    %1603 = vmatpush1.msra.mxu0 %v1092
    %1604 = vmatprep.subr.mxu0 0.0
    %1605 = vmatpush1.msra.mxu0 %v1093
    %1606 = vmatprep.subr.mxu0 0.0
    %1607 = vmatpush1.msra.mxu0 %v1094
    %1608 = vmatprep.subr.mxu0 0.0
    %1609 = vmatpush1.msra.mxu0 %v1095
    %1610 = vmatprep.subr.mxu0 0.0
    %1611 = vmatpush1.msra.mxu0 0.0
    %1612 = vmatprep.subr.mxu0 0.0
    %1613 = vmatpush1.msra.mxu0 0.0
    %1614 = vmatprep.subr.mxu0 0.0
    %1615 = vmatpush1.msra.mxu0 0.0
    %1616 = vmatprep.subr.mxu0 0.0
    %1617 = vmatpush1.msra.mxu0 0.0
    %1618 = vmatprep.subr.mxu0 0.0
    %1619 = vmatpush1.msra.mxu0 0.0
    %1620 = vmatprep.subr.mxu0 0.0
    %1621 = vmatpush1.msra.mxu0 0.0
    %1622 = vmatprep.subr.mxu0 0.0
    %1623 = vmatpush1.msra.mxu0 0.0
    %1624 = vmatprep.subr.mxu0 0.0
    %1625 = vmatpush1.msra.mxu0 0.0
    %1626 = vmatprep.subr.mxu0 0.0
    %1627 = vmatpush1.msra.mxu0 0.0
    %1628 = vmatprep.subr.mxu0 0.0
    %1629 = vmatpush1.msra.mxu0 0.0
    %1630 = vmatprep.subr.mxu0 0.0
    %1631 = vmatpush1.msra.mxu0 0.0
    %1632 = vmatprep.subr.mxu0 0.0
    %1633 = vmatpush1.msra.mxu0 0.0
    %1634 = vmatprep.subr.mxu0 0.0
    %1635 = vmatpush1.msra.mxu0 0.0
    %1636 = vmatprep.subr.mxu0 0.0
    %1637 = vmatpush1.msra.mxu0 0.0
    %1638 = vmatprep.subr.mxu0 0.0
    %1639 = vmatpush1.msra.mxu0 0.0
    %1640 = vmatprep.subr.mxu0 0.0
    %1641 = vmatpush1.msra.mxu0 0.0
    %1642 = vmatprep.subr.mxu0 0.0
    %1643 = vmatpush1.msra.mxu0 0.0
    %1644 = vmatprep.subr.mxu0 0.0
    %1645 = vmatpush1.msra.mxu0 0.0
    %1646 = vmatprep.subr.mxu0 0.0
    %1647 = vmatpush1.msra.mxu0 0.0
    %1648 = vmatprep.subr.mxu0 0.0
    %1649 = vmatpush1.msra.mxu0 0.0
    %1650 = vmatprep.subr.mxu0 0.0
    %1651 = vmatpush1.msra.mxu0 0.0
    %1652 = vmatprep.subr.mxu0 0.0
    %1653 = vmatpush1.msra.mxu0 0.0
    %1654 = vmatprep.subr.mxu0 0.0
    %1655 = vmatpush1.msra.mxu0 0.0
    %1656 = vmatprep.subr.mxu0 0.0
    %1657 = vmatpush1.msra.mxu0 0.0
    %1658 = vmatprep.subr.mxu0 0.0
    %1659 = vmatpush1.msra.mxu0 0.0
    %1660 = vmatprep.subr.mxu0 0.0
    %1661 = vmatpush1.msra.mxu0 0.0
    %1662 = vmatprep.subr.mxu0 0.0
    %1663 = vmatpush1.msra.mxu0 0.0
    %1664 = vmatprep.subr.mxu0 0.0
    %1665 = vmatpush1.msra.mxu0 0.0
    %1666 = vmatprep.mubr.f32.mxu0 0.0
    %1667 = vmatmul.mubr.f32.gmra.mrb[0].mxu0 %v1600
    %v1668 = vpop.f32.mrb[0].mxu0
    %v1669 = vadd.f32 0.0, %v1668
    %v1670 = vpop.f32.mrb[0].mxu0
    %1671 = vdwg.mxu0
    %v1672 = vadd.f32 %v1596, %v1669
    %v1673 = vxor.u32 %v1672, 2147483648
    %v1674 = vmul.f32 %v1673, 1.442695
    %v1675 = vpow.pop %v1674
    %v1676 = vadd.f32 %v1675, 1.0
    %v1677 = vrcp.pop %v1676
    %v1678 = vmul.f32 1.0, %v1677
    %v1679 = vtanh.pop %v1672
    %v1680 = vmul.f32 %v1678, %v1589
    %1682 = vrot.lane.b32.xlu0 %v1679, 64
    %v1683 = vpop.permute.xlu0 %1682
    %v1685 = vmul.f32 %v1678, %v1683
    %1687 = vrot.lane.b32.xlu0 %v1685, 32
    %v1688 = vpop.permute.xlu0 %1687
    %v1690 = vadd.f32 %v1680, %v1688
    %v1691 = vtanh.pop %v1690
    %1693 = vrot.lane.b32.xlu0 %v1691, 64
    %v1694 = vpop.permute.xlu0 %1693
    %v1696 = vmul.f32 %v1678, %v1694
    %v1697 = vld [vmem:[%s786] sm:$0x3]
    %1699 = vrot.lane.b32.xlu0 %v1696, 32
    %v1700 = vpop.permute.xlu0 %1699
    %v1701 = vsel %vm156, %v1700, 0
    %1703 = vmatprep.subr.mxu0 0.0
    %1704 = vmatpush1.msra.mxu0 %v1092
    %1705 = vmatprep.subr.mxu0 0.0
    %1706 = vmatpush1.msra.mxu0 %v1093
    %1707 = vmatprep.subr.mxu0 0.0
    %1708 = vmatpush1.msra.mxu0 %v1094
    %1709 = vmatprep.subr.mxu0 0.0
    %1710 = vmatpush1.msra.mxu0 %v1095
    %1711 = vmatprep.subr.mxu0 0.0
    %1712 = vmatpush1.msra.mxu0 0.0
    %1713 = vmatprep.subr.mxu0 0.0
    %1714 = vmatpush1.msra.mxu0 0.0
    %1715 = vmatprep.subr.mxu0 0.0
    %1716 = vmatpush1.msra.mxu0 0.0
    %1717 = vmatprep.subr.mxu0 0.0
    %1718 = vmatpush1.msra.mxu0 0.0
    %1719 = vmatprep.subr.mxu0 0.0
    %1720 = vmatpush1.msra.mxu0 0.0
    %1721 = vmatprep.subr.mxu0 0.0
    %1722 = vmatpush1.msra.mxu0 0.0
    %1723 = vmatprep.subr.mxu0 0.0
    %1724 = vmatpush1.msra.mxu0 0.0
    %1725 = vmatprep.subr.mxu0 0.0
    %1726 = vmatpush1.msra.mxu0 0.0
    %1727 = vmatprep.subr.mxu0 0.0
    %1728 = vmatpush1.msra.mxu0 0.0
    %1729 = vmatprep.subr.mxu0 0.0
    %1730 = vmatpush1.msra.mxu0 0.0
    %1731 = vmatprep.subr.mxu0 0.0
    %1732 = vmatpush1.msra.mxu0 0.0
    %1733 = vmatprep.subr.mxu0 0.0
    %1734 = vmatpush1.msra.mxu0 0.0
    %1735 = vmatprep.subr.mxu0 0.0
    %1736 = vmatpush1.msra.mxu0 0.0
    %1737 = vmatprep.subr.mxu0 0.0
    %1738 = vmatpush1.msra.mxu0 0.0
    %1739 = vmatprep.subr.mxu0 0.0
    %1740 = vmatpush1.msra.mxu0 0.0
    %1741 = vmatprep.subr.mxu0 0.0
    %1742 = vmatpush1.msra.mxu0 0.0
    %1743 = vmatprep.subr.mxu0 0.0
    %1744 = vmatpush1.msra.mxu0 0.0
    %1745 = vmatprep.subr.mxu0 0.0
    %1746 = vmatpush1.msra.mxu0 0.0
    %1747 = vmatprep.subr.mxu0 0.0
    %1748 = vmatpush1.msra.mxu0 0.0
    %1749 = vmatprep.subr.mxu0 0.0
    %1750 = vmatpush1.msra.mxu0 0.0
    %1751 = vmatprep.subr.mxu0 0.0
    %1752 = vmatpush1.msra.mxu0 0.0
    %1753 = vmatprep.subr.mxu0 0.0
    %1754 = vmatpush1.msra.mxu0 0.0
    %1755 = vmatprep.subr.mxu0 0.0
    %1756 = vmatpush1.msra.mxu0 0.0
    %1757 = vmatprep.subr.mxu0 0.0
    %1758 = vmatpush1.msra.mxu0 0.0
    %1759 = vmatprep.subr.mxu0 0.0
    %1760 = vmatpush1.msra.mxu0 0.0
    %1761 = vmatprep.subr.mxu0 0.0
    %1762 = vmatpush1.msra.mxu0 0.0
    %1763 = vmatprep.subr.mxu0 0.0
    %1764 = vmatpush1.msra.mxu0 0.0
    %1765 = vmatprep.subr.mxu0 0.0
    %1766 = vmatpush1.msra.mxu0 0.0
    %1767 = vmatprep.mubr.f32.mxu0 0.0
    %1768 = vmatmul.mubr.f32.gmra.mrb[0].mxu0 %v1701
    %v1769 = vpop.f32.mrb[0].mxu0
    %v1770 = vadd.f32 0.0, %v1769
    %v1771 = vpop.f32.mrb[0].mxu0
    %1772 = vdwg.mxu0
    %v1773 = vadd.f32 %v1697, %v1770
    %v1774 = vxor.u32 %v1773, 2147483648
    %v1775 = vmul.f32 %v1774, 1.442695
    %v1776 = vpow.pop %v1775
    %v1777 = vadd.f32 %v1776, 1.0
    %v1778 = vrcp.pop %v1777
    %v1779 = vmul.f32 1.0, %v1778
    %v1780 = vtanh.pop %v1773
    %v1781 = vmul.f32 %v1779, %v1690
    %1783 = vrot.lane.b32.xlu0 %v1780, 64
    %v1784 = vpop.permute.xlu0 %1783
    %v1786 = vmul.f32 %v1779, %v1784
    %1788 = vrot.lane.b32.xlu0 %v1786, 32
    %v1789 = vpop.permute.xlu0 %1788
    %v1791 = vadd.f32 %v1781, %v1789
    %v1792 = vtanh.pop %v1791
    %1794 = vrot.lane.b32.xlu0 %v1792, 64
    %v1795 = vpop.permute.xlu0 %1794
    %v1797 = vmul.f32 %v1779, %v1795
    %v1798 = vld [vmem:[%s891] sm:$0x3]
    %1800 = vrot.lane.b32.xlu0 %v1797, 32
    %v1801 = vpop.permute.xlu0 %1800
    %v1802 = vsel %vm156, %v1801, 0
    %1804 = vmatprep.subr.mxu0 0.0
    %1805 = vmatpush1.msra.mxu0 %v1092
    %1806 = vmatprep.subr.mxu0 0.0
    %1807 = vmatpush1.msra.mxu0 %v1093
    %1808 = vmatprep.subr.mxu0 0.0
    %1809 = vmatpush1.msra.mxu0 %v1094
    %1810 = vmatprep.subr.mxu0 0.0
    %1811 = vmatpush1.msra.mxu0 %v1095
    %1812 = vmatprep.subr.mxu0 0.0
    %1813 = vmatpush1.msra.mxu0 0.0
    %1814 = vmatprep.subr.mxu0 0.0
    %1815 = vmatpush1.msra.mxu0 0.0
    %1816 = vmatprep.subr.mxu0 0.0
    %1817 = vmatpush1.msra.mxu0 0.0
    %1818 = vmatprep.subr.mxu0 0.0
    %1819 = vmatpush1.msra.mxu0 0.0
    %1820 = vmatprep.subr.mxu0 0.0
    %1821 = vmatpush1.msra.mxu0 0.0
    %1822 = vmatprep.subr.mxu0 0.0
    %1823 = vmatpush1.msra.mxu0 0.0
    %1824 = vmatprep.subr.mxu0 0.0
    %1825 = vmatpush1.msra.mxu0 0.0
    %1826 = vmatprep.subr.mxu0 0.0
    %1827 = vmatpush1.msra.mxu0 0.0
    %1828 = vmatprep.subr.mxu0 0.0
    %1829 = vmatpush1.msra.mxu0 0.0
    %1830 = vmatprep.subr.mxu0 0.0
    %1831 = vmatpush1.msra.mxu0 0.0
    %1832 = vmatprep.subr.mxu0 0.0
    %1833 = vmatpush1.msra.mxu0 0.0
    %1834 = vmatprep.subr.mxu0 0.0
    %1835 = vmatpush1.msra.mxu0 0.0
    %1836 = vmatprep.subr.mxu0 0.0
    %1837 = vmatpush1.msra.mxu0 0.0
    %1838 = vmatprep.subr.mxu0 0.0
    %1839 = vmatpush1.msra.mxu0 0.0
    %1840 = vmatprep.subr.mxu0 0.0
    %1841 = vmatpush1.msra.mxu0 0.0
    %1842 = vmatprep.subr.mxu0 0.0
    %1843 = vmatpush1.msra.mxu0 0.0
    %1844 = vmatprep.subr.mxu0 0.0
    %1845 = vmatpush1.msra.mxu0 0.0
    %1846 = vmatprep.subr.mxu0 0.0
    %1847 = vmatpush1.msra.mxu0 0.0
    %1848 = vmatprep.subr.mxu0 0.0
    %1849 = vmatpush1.msra.mxu0 0.0
    %1850 = vmatprep.subr.mxu0 0.0
    %1851 = vmatpush1.msra.mxu0 0.0
    %1852 = vmatprep.subr.mxu0 0.0
    %1853 = vmatpush1.msra.mxu0 0.0
    %1854 = vmatprep.subr.mxu0 0.0
    %1855 = vmatpush1.msra.mxu0 0.0
    %1856 = vmatprep.subr.mxu0 0.0
    %1857 = vmatpush1.msra.mxu0 0.0
    %1858 = vmatprep.subr.mxu0 0.0
    %1859 = vmatpush1.msra.mxu0 0.0
    %1860 = vmatprep.subr.mxu0 0.0
    %1861 = vmatpush1.msra.mxu0 0.0
    %1862 = vmatprep.subr.mxu0 0.0
    %1863 = vmatpush1.msra.mxu0 0.0
    %1864 = vmatprep.subr.mxu0 0.0
    %1865 = vmatpush1.msra.mxu0 0.0
    %1866 = vmatprep.subr.mxu0 0.0
    %1867 = vmatpush1.msra.mxu0 0.0
    %1868 = vmatprep.mubr.f32.mxu0 0.0
    %1869 = vmatmul.mubr.f32.gmra.mrb[0].mxu0 %v1802
    %v1870 = vpop.f32.mrb[0].mxu0
    %v1871 = vadd.f32 0.0, %v1870
    %v1872 = vpop.f32.mrb[0].mxu0
    %1873 = vdwg.mxu0
    %v1874 = vadd.f32 %v1798, %v1871
    %v1875 = vxor.u32 %v1874, 2147483648
    %v1876 = vmul.f32 %v1875, 1.442695
    %v1877 = vpow.pop %v1876
    %v1878 = vadd.f32 %v1877, 1.0
    %v1879 = vrcp.pop %v1878
    %v1880 = vmul.f32 1.0, %v1879
    %v1881 = vtanh.pop %v1874
    %v1882 = vmul.f32 %v1880, %v1791
    %1884 = vrot.lane.b32.xlu0 %v1881, 64
    %v1885 = vpop.permute.xlu0 %1884
    %v1887 = vmul.f32 %v1880, %v1885
    %1889 = vrot.lane.b32.xlu0 %v1887, 32
    %v1890 = vpop.permute.xlu0 %1889
    %v1892 = vadd.f32 %v1882, %v1890
    %v1893 = vtanh.pop %v1892
    %1895 = vrot.lane.b32.xlu0 %v1893, 64
    %v1896 = vpop.permute.xlu0 %1895
    %v1898 = vmul.f32 %v1880, %v1896
    %v1899 = vld [vmem:[%s7] sm:$0xff]
    %v1900 = vld [vmem:[%s7 + $0x8] sm:$0xff]
    %v1901 = vld [vmem:[%s7 + $0x10] sm:$0xff]
    %v1902 = vld [vmem:[%s7 + $0x18] sm:$0xff]
    %v1903 = vld [vmem:[#allocation7] sm:$0x1]
    %v1905 = vlaneseq
    %v1906 = vshrl.u32 %v1905, 7
    %v1907 = vsub.s32 0, %v1906
    %v1908 = vrot.slane %v1903, %v1907
    %1911 = vrot.lane.b32.xlu0 %v1898, 32
    %v1912 = vpop.permute.xlu0 %1911
    %v1913 = vsel %vm156, %v1912, 0
    %1915 = vmatprep.subr.mxu0 0.0
    %1916 = vmatpush1.msra.mxu0 %v1899
    %1917 = vmatprep.subr.mxu0 0.0
    %1918 = vmatpush1.msra.mxu0 %v1900
    %1919 = vmatprep.subr.mxu0 0.0
    %1920 = vmatpush1.msra.mxu0 %v1901
    %1921 = vmatprep.subr.mxu0 0.0
    %1922 = vmatpush1.msra.mxu0 %v1902
    %1923 = vmatprep.subr.mxu0 0.0
    %1924 = vmatpush1.msra.mxu0 0.0
    %1925 = vmatprep.subr.mxu0 0.0
    %1926 = vmatpush1.msra.mxu0 0.0
    %1927 = vmatprep.subr.mxu0 0.0
    %1928 = vmatpush1.msra.mxu0 0.0
    %1929 = vmatprep.subr.mxu0 0.0
    %1930 = vmatpush1.msra.mxu0 0.0
    %1931 = vmatprep.subr.mxu0 0.0
    %1932 = vmatpush1.msra.mxu0 0.0
    %1933 = vmatprep.subr.mxu0 0.0
    %1934 = vmatpush1.msra.mxu0 0.0
    %1935 = vmatprep.subr.mxu0 0.0
    %1936 = vmatpush1.msra.mxu0 0.0
    %1937 = vmatprep.subr.mxu0 0.0
    %1938 = vmatpush1.msra.mxu0 0.0
    %1939 = vmatprep.subr.mxu0 0.0
    %1940 = vmatpush1.msra.mxu0 0.0
    %1941 = vmatprep.subr.mxu0 0.0
    %1942 = vmatpush1.msra.mxu0 0.0
    %1943 = vmatprep.subr.mxu0 0.0
    %1944 = vmatpush1.msra.mxu0 0.0
    %1945 = vmatprep.subr.mxu0 0.0
    %1946 = vmatpush1.msra.mxu0 0.0
    %1947 = vmatprep.subr.mxu0 0.0
    %1948 = vmatpush1.msra.mxu0 0.0
    %1949 = vmatprep.subr.mxu0 0.0
    %1950 = vmatpush1.msra.mxu0 0.0
    %1951 = vmatprep.subr.mxu0 0.0
    %1952 = vmatpush1.msra.mxu0 0.0
    %1953 = vmatprep.subr.mxu0 0.0
    %1954 = vmatpush1.msra.mxu0 0.0
    %1955 = vmatprep.subr.mxu0 0.0
    %1956 = vmatpush1.msra.mxu0 0.0
    %1957 = vmatprep.subr.mxu0 0.0
    %1958 = vmatpush1.msra.mxu0 0.0
    %1959 = vmatprep.subr.mxu0 0.0
    %1960 = vmatpush1.msra.mxu0 0.0
    %1961 = vmatprep.subr.mxu0 0.0
    %1962 = vmatpush1.msra.mxu0 0.0
    %1963 = vmatprep.subr.mxu0 0.0
    %1964 = vmatpush1.msra.mxu0 0.0
    %1965 = vmatprep.subr.mxu0 0.0
    %1966 = vmatpush1.msra.mxu0 0.0
    %1967 = vmatprep.subr.mxu0 0.0
    %1968 = vmatpush1.msra.mxu0 0.0
    %1969 = vmatprep.subr.mxu0 0.0
    %1970 = vmatpush1.msra.mxu0 0.0
    %1971 = vmatprep.subr.mxu0 0.0
    %1972 = vmatpush1.msra.mxu0 0.0
    %1973 = vmatprep.subr.mxu0 0.0
    %1974 = vmatpush1.msra.mxu0 0.0
    %1975 = vmatprep.subr.mxu0 0.0
    %1976 = vmatpush1.msra.mxu0 0.0
    %1977 = vmatprep.subr.mxu0 0.0
    %1978 = vmatpush1.msra.mxu0 0.0
    %1979 = vmatprep.mubr.f32.mxu0 0.0
    %1980 = vmatmul.mubr.f32.gmra.mrb[0].mxu0 %v1913
    %v1981 = vpop.f32.mrb[0].mxu0
    %v1982 = vadd.f32 %v1908, %v1981
    %v1983 = vpop.f32.mrb[0].mxu0
    %1984 = vdwg.mxu0
    %vm1985 = vcmask 25600
    %1986 = vst.msk [vmem:[#allocation9] sm:$0x3] %vm1985, %v1982
    // Predicated region
    $region46: #{lstm_forward.1} parent=1 // pred_check
      _
    $region47: #{lstm_forward.1} parent=1 // pred_check_branch
      %1988 = sbr.rel (0) target = $region49
    $region48: #{lstm_forward.1} parent=1 // pred_region
      %s1990 = ssub.s32 32, 32
      %1991 = vsyncadd [#allocation6], %s1990
      %s1993 = sshll.u32 [#allocation9], 4
      %s1994 = int_to_ptr.vmem [resolvable:$true] %s1993
      %1996 = dma.vmem_to_hbm [thread:$0]  %s1994, 32, %s9, [#allocation6]
    $region49: #{lstm_forward.1} parent=1 // pred_fallthru
      _
    // Predicated region
    $region50: #{lstm_forward.1} parent=1 // pred_check
      _
    $region51: #{lstm_forward.1} parent=1 // pred_check_branch
      %1998 = sbr.rel (0) target = $region53
    $region52: #{lstm_forward.1} parent=1 // pred_region
      %1999 = dma.done [#allocation6], 32
    $region53: #{lstm_forward.1} parent=1 // pred_fallthru
      _
    %2000 = vsyncpa [#allocation5], 1
    %2001 = vsyncpa [#allocation8], 1
    %2002 = vsyncpa [#allocation6], 1

</llo_original>
